<compile_context>
chip_gen: v6e
topology: v6e:2x2x1
jax: 0.10.0
libtpu: 0.0.40
codegen_flags: <defaults>
</compile_context>

<pallas_src>
import jax
import jax.numpy as jnp
from jax.experimental import pallas as pl
from jax.experimental import pallas as _pl_unused  # keep namespace tidy
from jax.experimental.pallas import tpu as pltpu  # noqa: F401 (TPU backend; no TPU-specific params needed for a single-block kernel)

SEQ = 8            # sequence length
BATCH = 2          # batch size (power of two -> batch-id mask via bitwise AND)
D_MODEL = 32       # d_model
NHEAD = 4          # nhead
HEAD_DIM = D_MODEL // NHEAD
DIM_FF = 64        # dim_feedforward
LN_EPS = 1e-5      # nn.LayerNorm default eps
SB = SEQ * BATCH   # rows handled by the single kernel invocation


def encoder_layer_kernel(x_ref, pos_ref, wqkvo_ref, wffn_ref, vec_ref, o_ref):
    """Whole layer in one invocation.  Rows are (seq, batch) pairs in s-major
    order (row = s*BATCH + b); attention between different batch elements is
    disabled with a static block-diagonal mask, so batching is free."""
    f32 = jnp.float32
    x = x_ref[...]                       # (SB, D)  src (also the attention value)
    pos = pos_ref[...]                   # (SB, D)
    qk_in = x + pos                      # q = k = with_pos_embed(src, pos)

    # --- packed parameters, loaded once --------------------------------------
    wqkvo = wqkvo_ref[...]               # (D, 4D) = [Wq^T | Wk^T | Wv^T | Wo^T]
    wq_t = wqkvo[:, 0 * D_MODEL:1 * D_MODEL]
    wk_t = wqkvo[:, 1 * D_MODEL:2 * D_MODEL]
    wv_t = wqkvo[:, 2 * D_MODEL:3 * D_MODEL]
    wo_t = wqkvo[:, 3 * D_MODEL:4 * D_MODEL]
    wffn = wffn_ref[...]                 # (D+FF, FF): rows 0:D = W1^T, D: = [W2^T | 0]
    w1_t = wffn[0:D_MODEL, :]                          # (D, FF)
    w2_t = wffn[D_MODEL:D_MODEL + DIM_FF, 0:D_MODEL]   # (FF, D)
    vec = vec_ref[...]                   # (10, FF): one bias/LN vector per row
    bq = vec[0:1, 0:D_MODEL]
    bk = vec[1:2, 0:D_MODEL]
    bv = vec[2:3, 0:D_MODEL]
    bo = vec[3:4, 0:D_MODEL]
    ln1w = vec[4:5, 0:D_MODEL]
    ln1b = vec[5:6, 0:D_MODEL]
    ln2w = vec[6:7, 0:D_MODEL]
    ln2b = vec[7:8, 0:D_MODEL]
    b2 = vec[8:9, 0:D_MODEL]
    b1 = vec[9:10, :]                    # (1, FF)

    # --- QKV projections: batch folded, 16-row LHS per matmul ---------------
    q = jnp.dot(qk_in, wq_t, preferred_element_type=f32) + bq
    k = jnp.dot(qk_in, wk_t, preferred_element_type=f32) + bk
    v = jnp.dot(x,     wv_t, preferred_element_type=f32) + bv

    # --- multi-head attention, heads fused via lane masks --------------------
    scale = 1.0 / (HEAD_DIM ** 0.5)
    qs = q * scale
    kT = k.T                             # (D, SB): one transpose shared by all heads
    lane = jax.lax.broadcasted_iota(jnp.int32, (1, D_MODEL), 1)
    rid = jax.lax.broadcasted_iota(jnp.int32, (SB, SB), 0)
    cid = jax.lax.broadcasted_iota(jnp.int32, (SB, SB), 1)
    # batch id of row r is r % BATCH; BATCH is a power of two -> bitwise AND
    same_batch = (rid & (BATCH - 1)) == (cid & (BATCH - 1))
    neg_big = f32(-1e30)

    attn = jnp.zeros((SB, D_MODEL), f32)
    for h in range(NHEAD):               # static, unrolled; no slicing / concat
        hmask = ((lane >= h * HEAD_DIM) &
                 (lane < (h + 1) * HEAD_DIM)).astype(f32)          # (1, D)
        s = jnp.dot(qs * hmask, kT, preferred_element_type=f32)    # (SB, SB)
        s = jnp.where(same_batch, s, neg_big)    # block-diagonal batch mask
        s = s - jnp.max(s, axis=-1, keepdims=True)
        e = jnp.exp(s)                           # masked entries underflow to 0
        p = e * pl.reciprocal(jnp.sum(e, axis=-1, keepdims=True), approx=True)
        attn = attn + jnp.dot(p, v * hmask, preferred_element_type=f32)

    attn = jnp.dot(attn, wo_t, preferred_element_type=f32) + bo

    # --- src = norm1(src + dropout1(src2)) ------------------------------------
    h1 = x + attn
    mu1 = jnp.mean(h1, axis=-1, keepdims=True)
    c1 = h1 - mu1
    var1 = jnp.mean(c1 * c1, axis=-1, keepdims=True)
    h1 = c1 * jax.lax.rsqrt(var1 + LN_EPS) * ln1w + ln1b

    # --- src2 = linear2(dropout(relu(linear1(src)))) --------------------------
    f = jnp.dot(h1, w1_t, preferred_element_type=f32) + b1
    f = jnp.maximum(f, 0.0)
    f = jnp.dot(f, w2_t, preferred_element_type=f32) + b2

    # --- src = norm2(src + dropout2(src2)) ------------------------------------
    h2 = h1 + f
    mu2 = jnp.mean(h2, axis=-1, keepdims=True)
    c2 = h2 - mu2
    var2 = jnp.mean(c2 * c2, axis=-1, keepdims=True)
    o_ref[...] = c2 * jax.lax.rsqrt(var2 + LN_EPS) * ln2w + ln2b


@jax.jit
def transformer_encoder_layer(src, pos, packed):
    """src, pos: (S, B, D) in the PyTorch MultiheadAttention convention.
    Returns (S, B, D).  No transposes: only free row-major reshapes."""
    S, B, D = src.shape
    w_qkvo, w_ffn, vecs = packed
    x = src.reshape(S * B, D)            # row = s*B + b  (pure metadata reshape)
    p = pos.reshape(S * B, D)
    # Gridless call: the whole problem is a single VMEM-resident block, so
    # there is no per-step pipeline overhead and no multi-core split.
    out = pl.pallas_call(
        encoder_layer_kernel,
        out_shape=jax.ShapeDtypeStruct((S * B, D), jnp.float32),
    )(x, p, w_qkvo, w_ffn, vecs)
    return out.reshape(S, B, D)


# ----------------------- parameter construction / packing --------------------
def make_params(key):
    """Random parameters in PyTorch nn.TransformerEncoderLayer layout."""
    ks = jax.random.split(key, 8)
    ipw = 0.05 * jax.random.normal(ks[0], (3 * D_MODEL, D_MODEL), jnp.float32)
    ipb = 0.05 * jax.random.normal(ks[1], (3 * D_MODEL,), jnp.float32)
    opw = 0.05 * jax.random.normal(ks[2], (D_MODEL, D_MODEL), jnp.float32)
    opb = 0.05 * jax.random.normal(ks[3], (D_MODEL,), jnp.float32)
    ln1w = jnp.ones((D_MODEL,), jnp.float32)
    ln1b = jnp.zeros((D_MODEL,), jnp.float32)
    w1 = 0.05 * jax.random.normal(ks[4], (DIM_FF, D_MODEL), jnp.float32)
    b1 = 0.05 * jax.random.normal(ks[5], (DIM_FF,), jnp.float32)
    w2 = 0.05 * jax.random.normal(ks[6], (D_MODEL, DIM_FF), jnp.float32)
    b2 = 0.05 * jax.random.normal(ks[7], (D_MODEL,), jnp.float32)
    ln2w = jnp.ones((D_MODEL,), jnp.float32)
    ln2b = jnp.zeros((D_MODEL,), jnp.float32)
    return (ipw, ipb, opw, opb, ln1w, ln1b, w1, b1, w2, b2, ln2w, ln2b)


def pack_params(params):
    """One-time host-side packing: pre-transposed weights, 3 parameter slabs
    (instead of 12 separate tiny inputs)."""
    (ipw, ipb, opw, opb, ln1w, ln1b, w1, b1, w2, b2, ln2w, ln2b) = params
    d, ff = D_MODEL, DIM_FF
    w_qkvo = jnp.concatenate([ipw.T, opw.T], axis=1)            # (32, 128)
    w_ffn = jnp.concatenate(
        [w1.T, jnp.pad(w2.T, ((0, 0), (0, ff - d)))], axis=0)   # (96, 64)

    def row(vv):
        return jnp.pad(vv, (0, ff - vv.shape[0]))[None, :]

    vecs = jnp.concatenate([
        row(ipb[0:d]), row(ipb[d:2 * d]), row(ipb[2 * d:3 * d]), row(opb),
        row(ln1w), row(ln1b), row(ln2w), row(ln2b),
        row(b2), row(b1)], axis=0)                               # (10, 64)
    return (w_qkvo, w_ffn, vecs)


# ------------- pure-JAX reference (mirrors PyTorch forward_post, eval) -------
def reference(src, pos, params):
    (ipw, ipb, opw, opb, ln1w, ln1b, w1, b1, w2, b2, ln2w, ln2b) = params
    d = D_MODEL
    qk = src + pos
    q = qk @ ipw[0:d].T + ipb[0:d]
    k = qk @ ipw[d:2 * d].T + ipb[d:2 * d]
    v = src @ ipw[2 * d:3 * d].T + ipb[2 * d:3 * d]
    S, B, _ = src.shape

    def heads(t):  # (S,B,D) -> (B, nhead, S, hd)
        return jnp.transpose(t.reshape(S, B, NHEAD, HEAD_DIM), (1, 2, 0, 3))

    qh, kh, vh = heads(q) / (HEAD_DIM ** 0.5), heads(k), heads(v)
    s = jnp.einsum('bhqd,bhkd->bhqk', qh, kh)
    p = jax.nn.softmax(s, axis=-1)
    o = jnp.einsum('bhqk,bhkd->bhqd', p, vh)
    o = jnp.transpose(o, (2, 0, 1, 3)).reshape(S, B, d)
    attn = o @ opw.T + opb

    def ln(x, g, b):
        mu = x.mean(-1, keepdims=True)
        var = ((x - mu) ** 2).mean(-1, keepdims=True)
        return (x - mu) / jnp.sqrt(var + LN_EPS) * g + b

    h1 = ln(src + attn, ln1w, ln1b)
    f = jnp.maximum(h1 @ w1.T + b1, 0.0) @ w2.T + b2
    return ln(h1 + f, ln2w, ln2b)


if __name__ == "__main__":
    key = jax.random.PRNGKey(0)
    k_src, k_pos, k_par = jax.random.split(key, 3)
    src = jax.random.normal(k_src, (SEQ, BATCH, D_MODEL), jnp.float32)
    pos = 0.1 * jax.random.normal(k_pos, (SEQ, BATCH, D_MODEL), jnp.float32)
    params = make_params(k_par)
    packed = pack_params(params)         # one-time packing, outside the hot path

    out = transformer_encoder_layer(src, pos, packed)
    out = jax.block_until_ready(out)

    ref = reference(src, pos, params)
    assert out.shape == (SEQ, BATCH, D_MODEL)
    # 1e-3 tolerance: the softmax denominator uses the EUP approx reciprocal.
    assert jnp.allclose(out, ref, rtol=1e-3, atol=1e-3), "mismatch vs reference"
    print("KERNEL_OK")
</pallas_src>

<mosaic_0001>
module attributes {stable_mosaic.version = 11 : i64} {
  func.func @encoder_layer_kernel(%arg0: memref<16x32xf32, #tpu.memory_space<vmem>>, %arg1: memref<16x32xf32, #tpu.memory_space<vmem>>, %arg2: memref<32x128xf32, #tpu.memory_space<vmem>>, %arg3: memref<96x64xf32, #tpu.memory_space<vmem>>, %arg4: memref<10x64xf32, #tpu.memory_space<vmem>>, %arg5: memref<16x32xf32, #tpu.memory_space<vmem>>) attributes {dimension_semantics = [], scalar_prefetch = 0 : i64, scratch_operands = 0 : i64, tpu.core_type = #tpu.core_type<tc>} {
    %c0 = arith.constant 0 : index
    %c0_0 = arith.constant 0 : index
    %0 = vector.load %arg0[%c0, %c0_0] : memref<16x32xf32, #tpu.memory_space<vmem>>, vector<16x32xf32>
    %c0_1 = arith.constant 0 : index
    %c0_2 = arith.constant 0 : index
    %1 = vector.load %arg1[%c0_1, %c0_2] : memref<16x32xf32, #tpu.memory_space<vmem>>, vector<16x32xf32>
    %2 = arith.addf %0, %1 : vector<16x32xf32>
    %c0_3 = arith.constant 0 : index
    %c0_4 = arith.constant 0 : index
    %3 = vector.load %arg2[%c0_3, %c0_4] : memref<32x128xf32, #tpu.memory_space<vmem>>, vector<32x128xf32>
    %4 = vector.extract_strided_slice %3 {offsets = [0, 0], sizes = [32, 32], strides = [1, 1]} : vector<32x128xf32> to vector<32x32xf32>
    %5 = vector.extract_strided_slice %3 {offsets = [0, 32], sizes = [32, 32], strides = [1, 1]} : vector<32x128xf32> to vector<32x32xf32>
    %6 = vector.extract_strided_slice %3 {offsets = [0, 64], sizes = [32, 32], strides = [1, 1]} : vector<32x128xf32> to vector<32x32xf32>
    %7 = vector.extract_strided_slice %3 {offsets = [0, 96], sizes = [32, 32], strides = [1, 1]} : vector<32x128xf32> to vector<32x32xf32>
    %c0_5 = arith.constant 0 : index
    %c0_6 = arith.constant 0 : index
    %8 = vector.load %arg3[%c0_5, %c0_6] : memref<96x64xf32, #tpu.memory_space<vmem>>, vector<96x64xf32>
    %9 = vector.extract_strided_slice %8 {offsets = [0, 0], sizes = [32, 64], strides = [1, 1]} : vector<96x64xf32> to vector<32x64xf32>
    %10 = vector.extract_strided_slice %8 {offsets = [32, 0], sizes = [64, 32], strides = [1, 1]} : vector<96x64xf32> to vector<64x32xf32>
    %c0_7 = arith.constant 0 : index
    %c0_8 = arith.constant 0 : index
    %11 = vector.load %arg4[%c0_7, %c0_8] : memref<10x64xf32, #tpu.memory_space<vmem>>, vector<10x64xf32>
    %12 = vector.extract_strided_slice %11 {offsets = [0, 0], sizes = [1, 32], strides = [1, 1]} : vector<10x64xf32> to vector<1x32xf32>
    %13 = vector.extract_strided_slice %11 {offsets = [1, 0], sizes = [1, 32], strides = [1, 1]} : vector<10x64xf32> to vector<1x32xf32>
    %14 = vector.extract_strided_slice %11 {offsets = [2, 0], sizes = [1, 32], strides = [1, 1]} : vector<10x64xf32> to vector<1x32xf32>
    %15 = vector.extract_strided_slice %11 {offsets = [3, 0], sizes = [1, 32], strides = [1, 1]} : vector<10x64xf32> to vector<1x32xf32>
    %16 = vector.extract_strided_slice %11 {offsets = [4, 0], sizes = [1, 32], strides = [1, 1]} : vector<10x64xf32> to vector<1x32xf32>
    %17 = vector.extract_strided_slice %11 {offsets = [5, 0], sizes = [1, 32], strides = [1, 1]} : vector<10x64xf32> to vector<1x32xf32>
    %18 = vector.extract_strided_slice %11 {offsets = [6, 0], sizes = [1, 32], strides = [1, 1]} : vector<10x64xf32> to vector<1x32xf32>
    %19 = vector.extract_strided_slice %11 {offsets = [7, 0], sizes = [1, 32], strides = [1, 1]} : vector<10x64xf32> to vector<1x32xf32>
    %20 = vector.extract_strided_slice %11 {offsets = [8, 0], sizes = [1, 32], strides = [1, 1]} : vector<10x64xf32> to vector<1x32xf32>
    %21 = vector.extract_strided_slice %11 {offsets = [9, 0], sizes = [1, 64], strides = [1, 1]} : vector<10x64xf32> to vector<1x64xf32>
    %cst = arith.constant dense<0.000000e+00> : vector<16x32xf32>
    %22 = tpu.matmul %2, %4, %cst {dimension_numbers = #tpu.dot_dimension_numbers<[1], [0], [0], [1], [0, 0, 1, 1], [], []>} : vector<16x32xf32>, vector<32x32xf32>, vector<16x32xf32> -> vector<16x32xf32>
    %23 = vector.broadcast %12 : vector<1x32xf32> to vector<16x32xf32>
    %24 = arith.addf %22, %23 : vector<16x32xf32>
    %cst_9 = arith.constant dense<0.000000e+00> : vector<16x32xf32>
    %25 = tpu.matmul %2, %5, %cst_9 {dimension_numbers = #tpu.dot_dimension_numbers<[1], [0], [0], [1], [0, 0, 1, 1], [], []>} : vector<16x32xf32>, vector<32x32xf32>, vector<16x32xf32> -> vector<16x32xf32>
    %26 = vector.broadcast %13 : vector<1x32xf32> to vector<16x32xf32>
    %27 = arith.addf %25, %26 : vector<16x32xf32>
    %cst_10 = arith.constant dense<0.000000e+00> : vector<16x32xf32>
    %28 = tpu.matmul %0, %6, %cst_10 {dimension_numbers = #tpu.dot_dimension_numbers<[1], [0], [0], [1], [0, 0, 1, 1], [], []>} : vector<16x32xf32>, vector<32x32xf32>, vector<16x32xf32> -> vector<16x32xf32>
    %29 = vector.broadcast %14 : vector<1x32xf32> to vector<16x32xf32>
    %30 = arith.addf %28, %29 : vector<16x32xf32>
    %cst_11 = arith.constant 0.353553385 : f32
    %31 = vector.broadcast %cst_11 : f32 to vector<16x32xf32>
    %32 = arith.mulf %24, %31 : vector<16x32xf32>
    %33 = tpu.transpose %27, [1, 0] : vector<16x32xf32> -> vector<32x16xf32>
    %34 = tpu.iota {dimensions = array<i32: 1>} : vector<1x32xi32>
    %35 = tpu.iota {dimensions = array<i32: 0>} : vector<16x16xi32>
    %36 = tpu.iota {dimensions = array<i32: 1>} : vector<16x16xi32>
    %c1_i32 = arith.constant 1 : i32
    %37 = vector.broadcast %c1_i32 : i32 to vector<16x16xi32>
    %38 = arith.andi %35, %37 : vector<16x16xi32>
    %c1_i32_12 = arith.constant 1 : i32
    %39 = vector.broadcast %c1_i32_12 : i32 to vector<16x16xi32>
    %40 = arith.andi %36, %39 : vector<16x16xi32>
    %41 = arith.cmpi eq, %38, %40 : vector<16x16xi32>
    %cst_13 = arith.constant 0.000000e+00 : f32
    %42 = vector.broadcast %cst_13 : f32 to vector<16x32xf32>
    %c0_i32 = arith.constant 0 : i32
    %43 = vector.broadcast %c0_i32 : i32 to vector<1x32xi32>
    %44 = arith.cmpi sge, %34, %43 : vector<1x32xi32>
    %c8_i32 = arith.constant 8 : i32
    %45 = vector.broadcast %c8_i32 : i32 to vector<1x32xi32>
    %46 = arith.cmpi slt, %34, %45 : vector<1x32xi32>
    %47 = arith.andi %44, %46 : vector<1x32xi1>
    %48 = arith.extui %47 : vector<1x32xi1> to vector<1x32xi32>
    %49 = arith.sitofp %48 : vector<1x32xi32> to vector<1x32xf32>
    %50 = vector.broadcast %49 : vector<1x32xf32> to vector<16x32xf32>
    %51 = arith.mulf %32, %50 : vector<16x32xf32>
    %cst_14 = arith.constant dense<0.000000e+00> : vector<16x16xf32>
    %52 = tpu.matmul %51, %33, %cst_14 {dimension_numbers = #tpu.dot_dimension_numbers<[1], [0], [0], [1], [0, 0, 1, 1], [], []>} : vector<16x32xf32>, vector<32x16xf32>, vector<16x16xf32> -> vector<16x16xf32>
    %cst_15 = arith.constant -1.000000e+30 : f32
    %53 = vector.broadcast %cst_15 : f32 to vector<16x16xf32>
    %54 = arith.select %41, %52, %53 : vector<16x16xi1>, vector<16x16xf32>
    %cst_16 = arith.constant dense<0xFF800000> : vector<16xf32>
    %55 = vector.multi_reduction <maximumf>, %54, %cst_16 [1] : vector<16x16xf32> to vector<16xf32>
    %56 = vector.shape_cast %55 : vector<16xf32> to vector<16x1xf32>
    %57 = vector.broadcast %56 : vector<16x1xf32> to vector<16x16xf32>
    %58 = arith.subf %54, %57 : vector<16x16xf32>
    %59 = math.exp %58 : vector<16x16xf32>
    %cst_17 = arith.constant dense<0.000000e+00> : vector<16xf32>
    %60 = vector.multi_reduction <add>, %59, %cst_17 [1] : vector<16x16xf32> to vector<16xf32>
    %61 = vector.shape_cast %60 : vector<16xf32> to vector<16x1xf32>
    %62 = tpu.reciprocal %61 {approx = true} : vector<16x1xf32> -> vector<16x1xf32>
    %63 = vector.broadcast %62 : vector<16x1xf32> to vector<16x16xf32>
    %64 = arith.mulf %59, %63 : vector<16x16xf32>
    %65 = vector.broadcast %49 : vector<1x32xf32> to vector<16x32xf32>
    %66 = arith.mulf %30, %65 : vector<16x32xf32>
    %cst_18 = arith.constant dense<0.000000e+00> : vector<16x32xf32>
    %67 = tpu.matmul %64, %66, %cst_18 {dimension_numbers = #tpu.dot_dimension_numbers<[1], [0], [0], [1], [0, 0, 1, 1], [], []>} : vector<16x16xf32>, vector<16x32xf32>, vector<16x32xf32> -> vector<16x32xf32>
    %68 = arith.addf %42, %67 : vector<16x32xf32>
    %c8_i32_19 = arith.constant 8 : i32
    %69 = vector.broadcast %c8_i32_19 : i32 to vector<1x32xi32>
    %70 = arith.cmpi sge, %34, %69 : vector<1x32xi32>
    %c16_i32 = arith.constant 16 : i32
    %71 = vector.broadcast %c16_i32 : i32 to vector<1x32xi32>
    %72 = arith.cmpi slt, %34, %71 : vector<1x32xi32>
    %73 = arith.andi %70, %72 : vector<1x32xi1>
    %74 = arith.extui %73 : vector<1x32xi1> to vector<1x32xi32>
    %75 = arith.sitofp %74 : vector<1x32xi32> to vector<1x32xf32>
    %76 = vector.broadcast %75 : vector<1x32xf32> to vector<16x32xf32>
    %77 = arith.mulf %32, %76 : vector<16x32xf32>
    %cst_20 = arith.constant dense<0.000000e+00> : vector<16x16xf32>
    %78 = tpu.matmul %77, %33, %cst_20 {dimension_numbers = #tpu.dot_dimension_numbers<[1], [0], [0], [1], [0, 0, 1, 1], [], []>} : vector<16x32xf32>, vector<32x16xf32>, vector<16x16xf32> -> vector<16x16xf32>
    %cst_21 = arith.constant -1.000000e+30 : f32
    %79 = vector.broadcast %cst_21 : f32 to vector<16x16xf32>
    %80 = arith.select %41, %78, %79 : vector<16x16xi1>, vector<16x16xf32>
    %cst_22 = arith.constant dense<0xFF800000> : vector<16xf32>
    %81 = vector.multi_reduction <maximumf>, %80, %cst_22 [1] : vector<16x16xf32> to vector<16xf32>
    %82 = vector.shape_cast %81 : vector<16xf32> to vector<16x1xf32>
    %83 = vector.broadcast %82 : vector<16x1xf32> to vector<16x16xf32>
    %84 = arith.subf %80, %83 : vector<16x16xf32>
    %85 = math.exp %84 : vector<16x16xf32>
    %cst_23 = arith.constant dense<0.000000e+00> : vector<16xf32>
    %86 = vector.multi_reduction <add>, %85, %cst_23 [1] : vector<16x16xf32> to vector<16xf32>
    %87 = vector.shape_cast %86 : vector<16xf32> to vector<16x1xf32>
    %88 = tpu.reciprocal %87 {approx = true} : vector<16x1xf32> -> vector<16x1xf32>
    %89 = vector.broadcast %88 : vector<16x1xf32> to vector<16x16xf32>
    %90 = arith.mulf %85, %89 : vector<16x16xf32>
    %91 = vector.broadcast %75 : vector<1x32xf32> to vector<16x32xf32>
    %92 = arith.mulf %30, %91 : vector<16x32xf32>
    %cst_24 = arith.constant dense<0.000000e+00> : vector<16x32xf32>
    %93 = tpu.matmul %90, %92, %cst_24 {dimension_numbers = #tpu.dot_dimension_numbers<[1], [0], [0], [1], [0, 0, 1, 1], [], []>} : vector<16x16xf32>, vector<16x32xf32>, vector<16x32xf32> -> vector<16x32xf32>
    %94 = arith.addf %68, %93 : vector<16x32xf32>
    %c16_i32_25 = arith.constant 16 : i32
    %95 = vector.broadcast %c16_i32_25 : i32 to vector<1x32xi32>
    %96 = arith.cmpi sge, %34, %95 : vector<1x32xi32>
    %c24_i32 = arith.constant 24 : i32
    %97 = vector.broadcast %c24_i32 : i32 to vector<1x32xi32>
    %98 = arith.cmpi slt, %34, %97 : vector<1x32xi32>
    %99 = arith.andi %96, %98 : vector<1x32xi1>
    %100 = arith.extui %99 : vector<1x32xi1> to vector<1x32xi32>
    %101 = arith.sitofp %100 : vector<1x32xi32> to vector<1x32xf32>
    %102 = vector.broadcast %101 : vector<1x32xf32> to vector<16x32xf32>
    %103 = arith.mulf %32, %102 : vector<16x32xf32>
    %cst_26 = arith.constant dense<0.000000e+00> : vector<16x16xf32>
    %104 = tpu.matmul %103, %33, %cst_26 {dimension_numbers = #tpu.dot_dimension_numbers<[1], [0], [0], [1], [0, 0, 1, 1], [], []>} : vector<16x32xf32>, vector<32x16xf32>, vector<16x16xf32> -> vector<16x16xf32>
    %cst_27 = arith.constant -1.000000e+30 : f32
    %105 = vector.broadcast %cst_27 : f32 to vector<16x16xf32>
    %106 = arith.select %41, %104, %105 : vector<16x16xi1>, vector<16x16xf32>
    %cst_28 = arith.constant dense<0xFF800000> : vector<16xf32>
    %107 = vector.multi_reduction <maximumf>, %106, %cst_28 [1] : vector<16x16xf32> to vector<16xf32>
    %108 = vector.shape_cast %107 : vector<16xf32> to vector<16x1xf32>
    %109 = vector.broadcast %108 : vector<16x1xf32> to vector<16x16xf32>
    %110 = arith.subf %106, %109 : vector<16x16xf32>
    %111 = math.exp %110 : vector<16x16xf32>
    %cst_29 = arith.constant dense<0.000000e+00> : vector<16xf32>
    %112 = vector.multi_reduction <add>, %111, %cst_29 [1] : vector<16x16xf32> to vector<16xf32>
    %113 = vector.shape_cast %112 : vector<16xf32> to vector<16x1xf32>
    %114 = tpu.reciprocal %113 {approx = true} : vector<16x1xf32> -> vector<16x1xf32>
    %115 = vector.broadcast %114 : vector<16x1xf32> to vector<16x16xf32>
    %116 = arith.mulf %111, %115 : vector<16x16xf32>
    %117 = vector.broadcast %101 : vector<1x32xf32> to vector<16x32xf32>
    %118 = arith.mulf %30, %117 : vector<16x32xf32>
    %cst_30 = arith.constant dense<0.000000e+00> : vector<16x32xf32>
    %119 = tpu.matmul %116, %118, %cst_30 {dimension_numbers = #tpu.dot_dimension_numbers<[1], [0], [0], [1], [0, 0, 1, 1], [], []>} : vector<16x16xf32>, vector<16x32xf32>, vector<16x32xf32> -> vector<16x32xf32>
    %120 = arith.addf %94, %119 : vector<16x32xf32>
    %c24_i32_31 = arith.constant 24 : i32
    %121 = vector.broadcast %c24_i32_31 : i32 to vector<1x32xi32>
    %122 = arith.cmpi sge, %34, %121 : vector<1x32xi32>
    %c32_i32 = arith.constant 32 : i32
    %123 = vector.broadcast %c32_i32 : i32 to vector<1x32xi32>
    %124 = arith.cmpi slt, %34, %123 : vector<1x32xi32>
    %125 = arith.andi %122, %124 : vector<1x32xi1>
    %126 = arith.extui %125 : vector<1x32xi1> to vector<1x32xi32>
    %127 = arith.sitofp %126 : vector<1x32xi32> to vector<1x32xf32>
    %128 = vector.broadcast %127 : vector<1x32xf32> to vector<16x32xf32>
    %129 = arith.mulf %32, %128 : vector<16x32xf32>
    %cst_32 = arith.constant dense<0.000000e+00> : vector<16x16xf32>
    %130 = tpu.matmul %129, %33, %cst_32 {dimension_numbers = #tpu.dot_dimension_numbers<[1], [0], [0], [1], [0, 0, 1, 1], [], []>} : vector<16x32xf32>, vector<32x16xf32>, vector<16x16xf32> -> vector<16x16xf32>
    %cst_33 = arith.constant -1.000000e+30 : f32
    %131 = vector.broadcast %cst_33 : f32 to vector<16x16xf32>
    %132 = arith.select %41, %130, %131 : vector<16x16xi1>, vector<16x16xf32>
    %cst_34 = arith.constant dense<0xFF800000> : vector<16xf32>
    %133 = vector.multi_reduction <maximumf>, %132, %cst_34 [1] : vector<16x16xf32> to vector<16xf32>
    %134 = vector.shape_cast %133 : vector<16xf32> to vector<16x1xf32>
    %135 = vector.broadcast %134 : vector<16x1xf32> to vector<16x16xf32>
    %136 = arith.subf %132, %135 : vector<16x16xf32>
    %137 = math.exp %136 : vector<16x16xf32>
    %cst_35 = arith.constant dense<0.000000e+00> : vector<16xf32>
    %138 = vector.multi_reduction <add>, %137, %cst_35 [1] : vector<16x16xf32> to vector<16xf32>
    %139 = vector.shape_cast %138 : vector<16xf32> to vector<16x1xf32>
    %140 = tpu.reciprocal %139 {approx = true} : vector<16x1xf32> -> vector<16x1xf32>
    %141 = vector.broadcast %140 : vector<16x1xf32> to vector<16x16xf32>
    %142 = arith.mulf %137, %141 : vector<16x16xf32>
    %143 = vector.broadcast %127 : vector<1x32xf32> to vector<16x32xf32>
    %144 = arith.mulf %30, %143 : vector<16x32xf32>
    %cst_36 = arith.constant dense<0.000000e+00> : vector<16x32xf32>
    %145 = tpu.matmul %142, %144, %cst_36 {dimension_numbers = #tpu.dot_dimension_numbers<[1], [0], [0], [1], [0, 0, 1, 1], [], []>} : vector<16x16xf32>, vector<16x32xf32>, vector<16x32xf32> -> vector<16x32xf32>
    %146 = arith.addf %120, %145 : vector<16x32xf32>
    %cst_37 = arith.constant dense<0.000000e+00> : vector<16x32xf32>
    %147 = tpu.matmul %146, %7, %cst_37 {dimension_numbers = #tpu.dot_dimension_numbers<[1], [0], [0], [1], [0, 0, 1, 1], [], []>} : vector<16x32xf32>, vector<32x32xf32>, vector<16x32xf32> -> vector<16x32xf32>
    %148 = vector.broadcast %15 : vector<1x32xf32> to vector<16x32xf32>
    %149 = arith.addf %147, %148 : vector<16x32xf32>
    %150 = arith.addf %0, %149 : vector<16x32xf32>
    %cst_38 = arith.constant dense<0.000000e+00> : vector<16xf32>
    %151 = vector.multi_reduction <add>, %150, %cst_38 [1] : vector<16x32xf32> to vector<16xf32>
    %152 = vector.shape_cast %151 : vector<16xf32> to vector<16x1xf32>
    %cst_39 = arith.constant 3.200000e+01 : f32
    %153 = vector.broadcast %cst_39 : f32 to vector<16x1xf32>
    %154 = arith.divf %152, %153 : vector<16x1xf32>
    %155 = vector.broadcast %154 : vector<16x1xf32> to vector<16x32xf32>
    %156 = arith.subf %150, %155 : vector<16x32xf32>
    %157 = arith.mulf %156, %156 : vector<16x32xf32>
    %cst_40 = arith.constant dense<0.000000e+00> : vector<16xf32>
    %158 = vector.multi_reduction <add>, %157, %cst_40 [1] : vector<16x32xf32> to vector<16xf32>
    %159 = vector.shape_cast %158 : vector<16xf32> to vector<16x1xf32>
    %cst_41 = arith.constant 3.200000e+01 : f32
    %160 = vector.broadcast %cst_41 : f32 to vector<16x1xf32>
    %161 = arith.divf %159, %160 : vector<16x1xf32>
    %cst_42 = arith.constant 9.99999974E-6 : f32
    %162 = vector.broadcast %cst_42 : f32 to vector<16x1xf32>
    %163 = arith.addf %161, %162 : vector<16x1xf32>
    %164 = math.rsqrt %163 : vector<16x1xf32>
    %165 = vector.broadcast %164 : vector<16x1xf32> to vector<16x32xf32>
    %166 = arith.mulf %156, %165 : vector<16x32xf32>
    %167 = vector.broadcast %16 : vector<1x32xf32> to vector<16x32xf32>
    %168 = arith.mulf %166, %167 : vector<16x32xf32>
    %169 = vector.broadcast %17 : vector<1x32xf32> to vector<16x32xf32>
    %170 = arith.addf %168, %169 : vector<16x32xf32>
    %cst_43 = arith.constant dense<0.000000e+00> : vector<16x64xf32>
    %171 = tpu.matmul %170, %9, %cst_43 {dimension_numbers = #tpu.dot_dimension_numbers<[1], [0], [0], [1], [0, 0, 1, 1], [], []>} : vector<16x32xf32>, vector<32x64xf32>, vector<16x64xf32> -> vector<16x64xf32>
    %172 = vector.broadcast %21 : vector<1x64xf32> to vector<16x64xf32>
    %173 = arith.addf %171, %172 : vector<16x64xf32>
    %cst_44 = arith.constant 0.000000e+00 : f32
    %174 = vector.broadcast %cst_44 : f32 to vector<16x64xf32>
    %175 = arith.maximumf %173, %174 : vector<16x64xf32>
    %cst_45 = arith.constant dense<0.000000e+00> : vector<16x32xf32>
    %176 = tpu.matmul %175, %10, %cst_45 {dimension_numbers = #tpu.dot_dimension_numbers<[1], [0], [0], [1], [0, 0, 1, 1], [], []>} : vector<16x64xf32>, vector<64x32xf32>, vector<16x32xf32> -> vector<16x32xf32>
    %177 = vector.broadcast %20 : vector<1x32xf32> to vector<16x32xf32>
    %178 = arith.addf %176, %177 : vector<16x32xf32>
    %179 = arith.addf %170, %178 : vector<16x32xf32>
    %cst_46 = arith.constant dense<0.000000e+00> : vector<16xf32>
    %180 = vector.multi_reduction <add>, %179, %cst_46 [1] : vector<16x32xf32> to vector<16xf32>
    %181 = vector.shape_cast %180 : vector<16xf32> to vector<16x1xf32>
    %cst_47 = arith.constant 3.200000e+01 : f32
    %182 = vector.broadcast %cst_47 : f32 to vector<16x1xf32>
    %183 = arith.divf %181, %182 : vector<16x1xf32>
    %184 = vector.broadcast %183 : vector<16x1xf32> to vector<16x32xf32>
    %185 = arith.subf %179, %184 : vector<16x32xf32>
    %186 = arith.mulf %185, %185 : vector<16x32xf32>
    %cst_48 = arith.constant dense<0.000000e+00> : vector<16xf32>
    %187 = vector.multi_reduction <add>, %186, %cst_48 [1] : vector<16x32xf32> to vector<16xf32>
    %188 = vector.shape_cast %187 : vector<16xf32> to vector<16x1xf32>
    %cst_49 = arith.constant 3.200000e+01 : f32
    %189 = vector.broadcast %cst_49 : f32 to vector<16x1xf32>
    %190 = arith.divf %188, %189 : vector<16x1xf32>
    %cst_50 = arith.constant 9.99999974E-6 : f32
    %191 = vector.broadcast %cst_50 : f32 to vector<16x1xf32>
    %192 = arith.addf %190, %191 : vector<16x1xf32>
    %193 = math.rsqrt %192 : vector<16x1xf32>
    %194 = vector.broadcast %193 : vector<16x1xf32> to vector<16x32xf32>
    %195 = arith.mulf %185, %194 : vector<16x32xf32>
    %196 = vector.broadcast %18 : vector<1x32xf32> to vector<16x32xf32>
    %197 = arith.mulf %195, %196 : vector<16x32xf32>
    %198 = vector.broadcast %19 : vector<1x32xf32> to vector<16x32xf32>
    %199 = arith.addf %197, %198 : vector<16x32xf32>
    %c0_51 = arith.constant 0 : index
    %c0_52 = arith.constant 0 : index
    %200 = vector.load %arg5[%c0_51, %c0_52] : memref<16x32xf32, #tpu.memory_space<vmem>>, vector<16x32xf32>
    tpu.vector_store %arg5[%c0_51, %c0_52], %199 {strides = array<i32>} : memref<16x32xf32, #tpu.memory_space<vmem>>, vector<16x32xf32>,
    return
  }
}

</mosaic_0001>

<llo_original>
// kernel: transformer_encoder_layer.1
$region0: #{transformer_encoder_layer.1}
  #allocation0 [shape = 'u32[]', space=smem, size = 0x4, offset = 0x4, fixed_abs, tag = 'smem constant byte address 0x4 - core index']
  #allocation1 [shape = 'u32[144,128]{1,0:T(1,128)}', space=vmem, size = 0x12000, scoped, tag = 'internal scratch']
  %s0 = inlined_call_operand.vmem [shape: f32[16,32], index: 0, kind: input, shape index: {}]
  %s1 = inlined_call_operand.vmem [shape: f32[16,32], index: 1, kind: input, shape index: {}]
  %s2 = inlined_call_operand.vmem [shape: f32[32,128], index: 2, kind: input, shape index: {}]
  %s3 = inlined_call_operand.vmem [shape: f32[96,64], index: 3, kind: input, shape index: {}]
  %s4 = inlined_call_operand.vmem [shape: f32[10,64], index: 4, kind: input, shape index: {}]
  %s5 = inlined_call_operand.hbm [shape: f32[16,32], index: 5, kind: output, shape index: {}]
  %s6 = sld [smem:[#allocation0]]
  $region30: #{transformer_encoder_layer.1} parent=0
    _
  %s8 = ssub.s32 1, %s6
  %s9 = scalar_select 0, %s8, %s6
  $region1: #{transformer_encoder_layer.1} parent=0
    #allocation2 [shape = 'u8[8192]{0}', space=vmem, size = 0x2000, scoped, tag = 'output window, operand 0, single buffered']
    #allocation3 [shape = 's32[1]{0}', space=sflag, size = 0x4, scoped, tag = 'scoped memory for transformer_encoder_layer.1']
    %10 = vsyncpa [#allocation3], 0
    // Predicated region
    $region2: #{transformer_encoder_layer.1} parent=1 // pred_check
      _
    $region3: #{transformer_encoder_layer.1} parent=1 // pred_check_branch
      %12 = sbr.rel (0) target = $region5
    $region4: #{transformer_encoder_layer.1} parent=1 // pred_region
      _
    $region5: #{transformer_encoder_layer.1} parent=1 // pred_fallthru
      _
    // Predicated region
    $region6: #{transformer_encoder_layer.1} parent=1 // pred_check
      _
    $region7: #{transformer_encoder_layer.1} parent=1 // pred_check_branch
      %14 = sbr.rel (0) target = $region9
    $region8: #{transformer_encoder_layer.1} parent=1 // pred_region
      _
    $region9: #{transformer_encoder_layer.1} parent=1 // pred_fallthru
      _
    // Predicated region
    $region10: #{transformer_encoder_layer.1} parent=1 // pred_check
      _
    $region11: #{transformer_encoder_layer.1} parent=1 // pred_check_branch
      %16 = sbr.rel (0) target = $region13
    $region12: #{transformer_encoder_layer.1} parent=1 // pred_region
      _
    $region13: #{transformer_encoder_layer.1} parent=1 // pred_fallthru
      _
    // Predicated region
    $region14: #{transformer_encoder_layer.1} parent=1 // pred_check
      _
    $region15: #{transformer_encoder_layer.1} parent=1 // pred_check_branch
      %18 = sbr.rel (0) target = $region17
    $region16: #{transformer_encoder_layer.1} parent=1 // pred_region
      _
    $region17: #{transformer_encoder_layer.1} parent=1 // pred_fallthru
      _
    // Predicated region
    $region18: #{transformer_encoder_layer.1} parent=1 // pred_check
      _
    $region19: #{transformer_encoder_layer.1} parent=1 // pred_check_branch
      %20 = sbr.rel (0) target = $region21
    $region20: #{transformer_encoder_layer.1} parent=1 // pred_region
      _
    $region21: #{transformer_encoder_layer.1} parent=1 // pred_fallthru
      _
    %v21 = vld [vmem:[%s0] sm:$0xff]
    %v22 = vld [vmem:[%s0 + $0x8] sm:$0xff]
    %v23 = vld [vmem:[%s1] sm:$0xff]
    %v24 = vld [vmem:[%s1 + $0x8] sm:$0xff]
    %v25 = vadd.f32 %v21, %v23
    %v26 = vadd.f32 %v22, %v24
    %v27 = vld [vmem:[%s2] sm:$0xff]
    %v28 = vld [vmem:[%s2 + $0x8] sm:$0xff]
    %v29 = vld [vmem:[%s2 + $0x10] sm:$0xff]
    %v30 = vld [vmem:[%s2 + $0x18] sm:$0xff]
    %v31 = vld [vmem:[%s3] sm:$0xff]
    %v32 = vld [vmem:[%s3 + $0x8] sm:$0xff]
    %v33 = vld [vmem:[%s3 + $0x10] sm:$0xff]
    %v34 = vld [vmem:[%s3 + $0x18] sm:$0xff]
    %v35 = vld [vmem:[%s3 + $0x20] sm:$0xff]
    %v36 = vld [vmem:[%s3 + $0x28] sm:$0xff]
    %v37 = vld [vmem:[%s3 + $0x30] sm:$0xff]
    %v38 = vld [vmem:[%s3 + $0x38] sm:$0xff]
    %v39 = vld [vmem:[%s3 + $0x40] sm:$0xff]
    %v40 = vld [vmem:[%s3 + $0x48] sm:$0xff]
    %v41 = vld [vmem:[%s3 + $0x50] sm:$0xff]
    %v42 = vld [vmem:[%s3 + $0x58] sm:$0xff]
    %v43 = vld [vmem:[%s4] sm:$0xff]
    %v44 = vld [vmem:[%s4 + $0x8] sm:$0x3]
    %v45 = vlaneseq
    %v46 = vshrl.u32 %v45, 7
    %v47 = vsub.s32 0, %v46
    %v48 = vrot.slane %v43, %v47
    %vm49 = vcmask 261120
    %v51 = vsel %vm49, %v25, 0
    %v54 = vsel %vm49, %v26, 0
    %56 = vmatprep.subr.mxu0 0.0
    %57 = vmatpush1.msra.mxu0 0.0
    %58 = vmatprep.subr.mxu0 0.0
    %59 = vmatpush1.msra.mxu0 0.0
    %60 = vmatprep.subr.mxu0 0.0
    %61 = vmatpush1.msra.mxu0 0.0
    %62 = vmatprep.subr.mxu0 0.0
    %63 = vmatpush1.msra.mxu0 0.0
    %64 = vmatprep.subr.mxu0 0.0
    %65 = vmatpush1.msra.mxu0 0.0
    %66 = vmatprep.subr.mxu0 0.0
    %67 = vmatpush1.msra.mxu0 0.0
    %68 = vmatprep.subr.mxu0 0.0
    %69 = vmatpush1.msra.mxu0 0.0
    %70 = vmatprep.subr.mxu0 0.0
    %71 = vmatpush1.msra.mxu0 0.0
    %72 = vmatprep.subr.mxu0 0.0
    %73 = vmatpush1.msra.mxu0 0.0
    %74 = vmatprep.subr.mxu0 0.0
    %75 = vmatpush1.msra.mxu0 0.0
    %76 = vmatprep.subr.mxu0 0.0
    %77 = vmatpush1.msra.mxu0 0.0
    %78 = vmatprep.subr.mxu0 0.0
    %79 = vmatpush1.msra.mxu0 0.0
    %80 = vmatprep.subr.mxu0 0.0
    %81 = vmatpush1.msra.mxu0 %v30
    %82 = vmatprep.subr.mxu0 0.0
    %83 = vmatpush1.msra.mxu0 %v29
    %84 = vmatprep.subr.mxu0 0.0
    %85 = vmatpush1.msra.mxu0 %v28
    %86 = vmatprep.subr.mxu0 0.0
    %87 = vmatpush1.msra.mxu0 %v27
    %88 = vmatprep.subr.mxu0 0.0
    %89 = vmatpush2.msra.mxu0 0.0
    %90 = vmatprep.subr.mxu0 0.0
    %91 = vmatpush2.msra.mxu0 0.0
    %92 = vmatprep.subr.mxu0 0.0
    %93 = vmatpush2.msra.mxu0 0.0
    %94 = vmatprep.subr.mxu0 0.0
    %95 = vmatpush2.msra.mxu0 0.0
    %96 = vmatprep.subr.mxu0 0.0
    %97 = vmatpush2.msra.mxu0 0.0
    %98 = vmatprep.subr.mxu0 0.0
    %99 = vmatpush2.msra.mxu0 0.0
    %100 = vmatprep.subr.mxu0 0.0
    %101 = vmatpush2.msra.mxu0 0.0
    %102 = vmatprep.subr.mxu0 0.0
    %103 = vmatpush2.msra.mxu0 0.0
    %104 = vmatprep.subr.mxu0 0.0
    %105 = vmatpush2.msra.mxu0 0.0
    %106 = vmatprep.subr.mxu0 0.0
    %107 = vmatpush2.msra.mxu0 0.0
    %108 = vmatprep.subr.mxu0 0.0
    %109 = vmatpush2.msra.mxu0 0.0
    %110 = vmatprep.subr.mxu0 0.0
    %111 = vmatpush2.msra.mxu0 0.0
    %112 = vmatprep.subr.mxu0 0.0
    %113 = vmatpush2.msra.mxu0 0.0
    %114 = vmatprep.subr.mxu0 0.0
    %115 = vmatpush2.msra.mxu0 0.0
    %116 = vmatprep.subr.mxu0 0.0
    %117 = vmatpush2.msra.mxu0 0.0
    %118 = vmatprep.subr.mxu0 0.0
    %119 = vmatpush2.msra.mxu0 0.0
    %120 = vmatprep.mubr.f32.mxu0 0.0
    %121 = vmatmul.mubr.f32.gmra.mxu0 %v51
    %v122 = vpop.f32.mrf.mxu0
    %v123 = vadd.f32 %v48, %v122
    %v124 = vpop.f32.mrf.mxu0
    %125 = vmatprep.mubr.f32.mxu0 0.0
    %126 = vmatmul.mubr.f32.gmra.mxu0 %v54
    %v127 = vpop.f32.mrf.mxu0
    %v128 = vadd.f32 %v48, %v127
    %v129 = vpop.f32.mrf.mxu0
    %130 = vdwg.mxu0
    %v131 = vlaneseq
    %v132 = vshrl.u32 %v131, 7
    %v133 = vsub.s32 1, %v132
    %v134 = vrot.slane %v43, %v133
    %139 = vrot.lane.b32.xlu0 %v27, 96
    %v140 = vpop.permute.xlu0 %139
    %141 = vrot.lane.b32.xlu0 %v28, 96
    %v142 = vpop.permute.xlu0 %141
    %143 = vrot.lane.b32.xlu0 %v29, 96
    %v144 = vpop.permute.xlu0 %143
    %145 = vrot.lane.b32.xlu0 %v30, 96
    %v146 = vpop.permute.xlu0 %145
    %151 = vmatprep.subr.mxu0 0.0
    %152 = vmatpush1.msra.mxu0 0.0
    %153 = vmatprep.subr.mxu0 0.0
    %154 = vmatpush1.msra.mxu0 0.0
    %155 = vmatprep.subr.mxu0 0.0
    %156 = vmatpush1.msra.mxu0 0.0
    %157 = vmatprep.subr.mxu0 0.0
    %158 = vmatpush1.msra.mxu0 0.0
    %159 = vmatprep.subr.mxu0 0.0
    %160 = vmatpush1.msra.mxu0 0.0
    %161 = vmatprep.subr.mxu0 0.0
    %162 = vmatpush1.msra.mxu0 0.0
    %163 = vmatprep.subr.mxu0 0.0
    %164 = vmatpush1.msra.mxu0 0.0
    %165 = vmatprep.subr.mxu0 0.0
    %166 = vmatpush1.msra.mxu0 0.0
    %167 = vmatprep.subr.mxu0 0.0
    %168 = vmatpush1.msra.mxu0 0.0
    %169 = vmatprep.subr.mxu0 0.0
    %170 = vmatpush1.msra.mxu0 0.0
    %171 = vmatprep.subr.mxu0 0.0
    %172 = vmatpush1.msra.mxu0 0.0
    %173 = vmatprep.subr.mxu0 0.0
    %174 = vmatpush1.msra.mxu0 0.0
    %175 = vmatprep.subr.mxu0 0.0
    %176 = vmatpush1.msra.mxu0 %v146
    %177 = vmatprep.subr.mxu0 0.0
    %178 = vmatpush1.msra.mxu0 %v144
    %179 = vmatprep.subr.mxu0 0.0
    %180 = vmatpush1.msra.mxu0 %v142
    %181 = vmatprep.subr.mxu0 0.0
    %182 = vmatpush1.msra.mxu0 %v140
    %183 = vmatprep.subr.mxu0 0.0
    %184 = vmatpush2.msra.mxu0 0.0
    %185 = vmatprep.subr.mxu0 0.0
    %186 = vmatpush2.msra.mxu0 0.0
    %187 = vmatprep.subr.mxu0 0.0
    %188 = vmatpush2.msra.mxu0 0.0
    %189 = vmatprep.subr.mxu0 0.0
    %190 = vmatpush2.msra.mxu0 0.0
    %191 = vmatprep.subr.mxu0 0.0
    %192 = vmatpush2.msra.mxu0 0.0
    %193 = vmatprep.subr.mxu0 0.0
    %194 = vmatpush2.msra.mxu0 0.0
    %195 = vmatprep.subr.mxu0 0.0
    %196 = vmatpush2.msra.mxu0 0.0
    %197 = vmatprep.subr.mxu0 0.0
    %198 = vmatpush2.msra.mxu0 0.0
    %199 = vmatprep.subr.mxu0 0.0
    %200 = vmatpush2.msra.mxu0 0.0
    %201 = vmatprep.subr.mxu0 0.0
    %202 = vmatpush2.msra.mxu0 0.0
    %203 = vmatprep.subr.mxu0 0.0
    %204 = vmatpush2.msra.mxu0 0.0
    %205 = vmatprep.subr.mxu0 0.0
    %206 = vmatpush2.msra.mxu0 0.0
    %207 = vmatprep.subr.mxu0 0.0
    %208 = vmatpush2.msra.mxu0 0.0
    %209 = vmatprep.subr.mxu0 0.0
    %210 = vmatpush2.msra.mxu0 0.0
    %211 = vmatprep.subr.mxu0 0.0
    %212 = vmatpush2.msra.mxu0 0.0
    %213 = vmatprep.subr.mxu0 0.0
    %214 = vmatpush2.msra.mxu0 0.0
    %215 = vmatprep.mubr.f32.mxu0 0.0
    %216 = vmatmul.mubr.f32.gmra.mxu0 %v51
    %v217 = vpop.f32.mrf.mxu0
    %v218 = vadd.f32 %v134, %v217
    %v219 = vpop.f32.mrf.mxu0
    %220 = vmatprep.mubr.f32.mxu0 0.0
    %221 = vmatmul.mubr.f32.gmra.mxu0 %v54
    %v222 = vpop.f32.mrf.mxu0
    %v223 = vadd.f32 %v134, %v222
    %v224 = vpop.f32.mrf.mxu0
    %225 = vdwg.mxu0
    %v226 = vlaneseq
    %v227 = vshrl.u32 %v226, 7
    %v228 = vsub.s32 2, %v227
    %v229 = vrot.slane %v43, %v228
    %230 = vrot.lane.b32.xlu0 %v27, 64
    %v231 = vpop.permute.xlu0 %230
    %232 = vrot.lane.b32.xlu0 %v28, 64
    %v233 = vpop.permute.xlu0 %232
    %234 = vrot.lane.b32.xlu0 %v29, 64
    %v235 = vpop.permute.xlu0 %234
    %236 = vrot.lane.b32.xlu0 %v30, 64
    %v237 = vpop.permute.xlu0 %236
    %v243 = vsel %vm49, %v21, 0
    %v246 = vsel %vm49, %v22, 0
    %248 = vmatprep.subr.mxu0 0.0
    %249 = vmatpush1.msra.mxu0 0.0
    %250 = vmatprep.subr.mxu0 0.0
    %251 = vmatpush1.msra.mxu0 0.0
    %252 = vmatprep.subr.mxu0 0.0
    %253 = vmatpush1.msra.mxu0 0.0
    %254 = vmatprep.subr.mxu0 0.0
    %255 = vmatpush1.msra.mxu0 0.0
    %256 = vmatprep.subr.mxu0 0.0
    %257 = vmatpush1.msra.mxu0 0.0
    %258 = vmatprep.subr.mxu0 0.0
    %259 = vmatpush1.msra.mxu0 0.0
    %260 = vmatprep.subr.mxu0 0.0
    %261 = vmatpush1.msra.mxu0 0.0
    %262 = vmatprep.subr.mxu0 0.0
    %263 = vmatpush1.msra.mxu0 0.0
    %264 = vmatprep.subr.mxu0 0.0
    %265 = vmatpush1.msra.mxu0 0.0
    %266 = vmatprep.subr.mxu0 0.0
    %267 = vmatpush1.msra.mxu0 0.0
    %268 = vmatprep.subr.mxu0 0.0
    %269 = vmatpush1.msra.mxu0 0.0
    %270 = vmatprep.subr.mxu0 0.0
    %271 = vmatpush1.msra.mxu0 0.0
    %272 = vmatprep.subr.mxu0 0.0
    %273 = vmatpush1.msra.mxu0 %v237
    %274 = vmatprep.subr.mxu0 0.0
    %275 = vmatpush1.msra.mxu0 %v235
    %276 = vmatprep.subr.mxu0 0.0
    %277 = vmatpush1.msra.mxu0 %v233
    %278 = vmatprep.subr.mxu0 0.0
    %279 = vmatpush1.msra.mxu0 %v231
    %280 = vmatprep.subr.mxu0 0.0
    %281 = vmatpush2.msra.mxu0 0.0
    %282 = vmatprep.subr.mxu0 0.0
    %283 = vmatpush2.msra.mxu0 0.0
    %284 = vmatprep.subr.mxu0 0.0
    %285 = vmatpush2.msra.mxu0 0.0
    %286 = vmatprep.subr.mxu0 0.0
    %287 = vmatpush2.msra.mxu0 0.0
    %288 = vmatprep.subr.mxu0 0.0
    %289 = vmatpush2.msra.mxu0 0.0
    %290 = vmatprep.subr.mxu0 0.0
    %291 = vmatpush2.msra.mxu0 0.0
    %292 = vmatprep.subr.mxu0 0.0
    %293 = vmatpush2.msra.mxu0 0.0
    %294 = vmatprep.subr.mxu0 0.0
    %295 = vmatpush2.msra.mxu0 0.0
    %296 = vmatprep.subr.mxu0 0.0
    %297 = vmatpush2.msra.mxu0 0.0
    %298 = vmatprep.subr.mxu0 0.0
    %299 = vmatpush2.msra.mxu0 0.0
    %300 = vmatprep.subr.mxu0 0.0
    %301 = vmatpush2.msra.mxu0 0.0
    %302 = vmatprep.subr.mxu0 0.0
    %303 = vmatpush2.msra.mxu0 0.0
    %304 = vmatprep.subr.mxu0 0.0
    %305 = vmatpush2.msra.mxu0 0.0
    %306 = vmatprep.subr.mxu0 0.0
    %307 = vmatpush2.msra.mxu0 0.0
    %308 = vmatprep.subr.mxu0 0.0
    %309 = vmatpush2.msra.mxu0 0.0
    %310 = vmatprep.subr.mxu0 0.0
    %311 = vmatpush2.msra.mxu0 0.0
    %312 = vmatprep.mubr.f32.mxu0 0.0
    %313 = vmatmul.mubr.f32.gmra.mxu0 %v243
    %v314 = vpop.f32.mrf.mxu0
    %v315 = vadd.f32 %v229, %v314
    %v316 = vpop.f32.mrf.mxu0
    %317 = vmatprep.mubr.f32.mxu0 0.0
    %318 = vmatmul.mubr.f32.gmra.mxu0 %v246
    %v319 = vpop.f32.mrf.mxu0
    %v320 = vadd.f32 %v229, %v319
    %v321 = vpop.f32.mrf.mxu0
    %322 = vdwg.mxu0
    %v323 = vmul.f32 %v123, 0.35355338
    %v324 = vmul.f32 %v128, 0.35355338
    %v325 = vlaneseq
    %v326 = vand.u32 %v325, 127
    %v327 = vlaneseq
    %v328 = vshrl.u32 %v327, 7
    %v329 = vadd.s32 %v328, 8
    %v330 = vand.u32 %v328, 1
    %v331 = vand.u32 %v329, 1
    %v332 = vand.u32 %v326, 1
    %vm333 = vcmp.eq.s32.totalorder %v330, %v332
    %vm334 = vcmp.eq.s32.totalorder %v331, %v332
    %vm335 = vcmp.ge.s32.totalorder %v326, 0
    %vm336 = vcmp.lt.s32.totalorder %v326, 8
    %vm337 = vmand %vm335, %vm336
    %v338 = vsel %vm337, 1, 0
    %v339 = vcvt.s32.f32 %v338
    %v340 = vmul.f32 %v323, %v339
    %v341 = vmul.f32 %v324, %v339
    %v343 = vsel %vm49, %v340, 0
    %v346 = vsel %vm49, %v341, 0
    %v349 = vsel %vm49, %v218, 0
    %v352 = vsel %vm49, %v223, 0
    %354 = vmatprep.subr.mxu0 0.0
    %355 = vmatpush1.xpose.msra.mxu0 0.0
    %356 = vmatprep.subr.mxu0 0.0
    %357 = vmatpush1.xpose.msra.mxu0 0.0
    %358 = vmatprep.subr.mxu0 0.0
    %359 = vmatpush1.xpose.msra.mxu0 0.0
    %360 = vmatprep.subr.mxu0 0.0
    %361 = vmatpush1.xpose.msra.mxu0 0.0
    %362 = vmatprep.subr.mxu0 0.0
    %363 = vmatpush1.xpose.msra.mxu0 0.0
    %364 = vmatprep.subr.mxu0 0.0
    %365 = vmatpush1.xpose.msra.mxu0 0.0
    %366 = vmatprep.subr.mxu0 0.0
    %367 = vmatpush1.xpose.msra.mxu0 0.0
    %368 = vmatprep.subr.mxu0 0.0
    %369 = vmatpush1.xpose.msra.mxu0 0.0
    %370 = vmatprep.subr.mxu0 0.0
    %371 = vmatpush1.xpose.msra.mxu0 0.0
    %372 = vmatprep.subr.mxu0 0.0
    %373 = vmatpush1.xpose.msra.mxu0 0.0
    %374 = vmatprep.subr.mxu0 0.0
    %375 = vmatpush1.xpose.msra.mxu0 0.0
    %376 = vmatprep.subr.mxu0 0.0
    %377 = vmatpush1.xpose.msra.mxu0 0.0
    %378 = vmatprep.subr.mxu0 0.0
    %379 = vmatpush1.xpose.msra.mxu0 0.0
    %380 = vmatprep.subr.mxu0 0.0
    %381 = vmatpush1.xpose.msra.mxu0 0.0
    %382 = vmatprep.subr.mxu0 0.0
    %383 = vmatpush1.xpose.msra.mxu0 %v352
    %384 = vmatprep.subr.mxu0 0.0
    %385 = vmatpush1.xpose.msra.mxu0 %v349
    %386 = vmatprep.subr.mxu0 0.0
    %387 = vmatpush2.xpose.msra.mxu0 0.0
    %388 = vmatprep.subr.mxu0 0.0
    %389 = vmatpush2.xpose.msra.mxu0 0.0
    %390 = vmatprep.subr.mxu0 0.0
    %391 = vmatpush2.xpose.msra.mxu0 0.0
    %392 = vmatprep.subr.mxu0 0.0
    %393 = vmatpush2.xpose.msra.mxu0 0.0
    %394 = vmatprep.subr.mxu0 0.0
    %395 = vmatpush2.xpose.msra.mxu0 0.0
    %396 = vmatprep.subr.mxu0 0.0
    %397 = vmatpush2.xpose.msra.mxu0 0.0
    %398 = vmatprep.subr.mxu0 0.0
    %399 = vmatpush2.xpose.msra.mxu0 0.0
    %400 = vmatprep.subr.mxu0 0.0
    %401 = vmatpush2.xpose.msra.mxu0 0.0
    %402 = vmatprep.subr.mxu0 0.0
    %403 = vmatpush2.xpose.msra.mxu0 0.0
    %404 = vmatprep.subr.mxu0 0.0
    %405 = vmatpush2.xpose.msra.mxu0 0.0
    %406 = vmatprep.subr.mxu0 0.0
    %407 = vmatpush2.xpose.msra.mxu0 0.0
    %408 = vmatprep.subr.mxu0 0.0
    %409 = vmatpush2.xpose.msra.mxu0 0.0
    %410 = vmatprep.subr.mxu0 0.0
    %411 = vmatpush2.xpose.msra.mxu0 0.0
    %412 = vmatprep.subr.mxu0 0.0
    %413 = vmatpush2.xpose.msra.mxu0 0.0
    %414 = vmatprep.subr.mxu0 0.0
    %415 = vmatpush2.xpose.msra.mxu0 0.0
    %416 = vmatprep.subr.mxu0 0.0
    %417 = vmatpush2.xpose.msra.mxu0 0.0
    %418 = vmatprep.mubr.f32.mxu0 0.0
    %419 = vmatmul.mubr.f32.gmra.mxu0 %v343
    %v420 = vpop.f32.mrf.mxu0
    %v421 = vadd.f32 0.0, %v420
    %v422 = vpop.f32.mrf.mxu0
    %423 = vmatprep.mubr.f32.mxu0 0.0
    %424 = vmatmul.mubr.f32.gmra.mxu0 %v346
    %v425 = vpop.f32.mrf.mxu0
    %v426 = vadd.f32 0.0, %v425
    %v427 = vpop.f32.mrf.mxu0
    %428 = vdwg.mxu0
    %v429 = vsel %vm333, %v421, -1e+30
    %v430 = vsel %vm334, %v426, -1e+30
    %vm431 = vcmask 130048
    %v432 = vsel %vm431, %v429, -inf
    %433 = vmax.xlane.f32.xlu0 %v432
    %v434 = vpop.xlane.xlu0 %433
    %v435 = vsel %vm431, %v430, -inf
    %436 = vmax.xlane.f32.xlu0 %v435
    %v437 = vpop.xlane.xlu0 %436
    %v438 = vsub.f32 %v429, %v434
    %v439 = vsub.f32 %v430, %v437
    %v440 = vmul.f32 %v438, 1.442695
    %v441 = vpow.pop %v440
    %v442 = vmul.f32 %v439, 1.442695
    %v443 = vpow.pop %v442
    %v444 = vsel %vm431, %v441, 0.0
    %445 = vadd.xlane.f32.xlu0 %v444
    %v446 = vpop.xlane.xlu0 %445
    %v447 = vsel %vm431, %v443, 0.0
    %448 = vadd.xlane.f32.xlu0 %v447
    %v449 = vpop.xlane.xlu0 %448
    %v450 = vrcp.pop %v446
    %v451 = vrcp.pop %v449
    %v452 = vmul.f32 %v441, %v450
    %v453 = vmul.f32 %v443, %v451
    %v454 = vmul.f32 %v315, %v339
    %v455 = vmul.f32 %v320, %v339
    %vm456 = vcmp.ge.s32.totalorder %v326, 8
    %vm457 = vcmp.lt.s32.totalorder %v326, 16
    %vm458 = vmand %vm456, %vm457
    %v459 = vsel %vm458, 1, 0
    %v460 = vcvt.s32.f32 %v459
    %v461 = vmul.f32 %v323, %v460
    %v462 = vmul.f32 %v324, %v460
    %v464 = vsel %vm49, %v461, 0
    %v467 = vsel %vm49, %v462, 0
    %469 = vmatprep.subr.mxu0 0.0
    %470 = vmatpush1.xpose.msra.mxu0 0.0
    %471 = vmatprep.subr.mxu0 0.0
    %472 = vmatpush1.xpose.msra.mxu0 0.0
    %473 = vmatprep.subr.mxu0 0.0
    %474 = vmatpush1.xpose.msra.mxu0 0.0
    %475 = vmatprep.subr.mxu0 0.0
    %476 = vmatpush1.xpose.msra.mxu0 0.0
    %477 = vmatprep.subr.mxu0 0.0
    %478 = vmatpush1.xpose.msra.mxu0 0.0
    %479 = vmatprep.subr.mxu0 0.0
    %480 = vmatpush1.xpose.msra.mxu0 0.0
    %481 = vmatprep.subr.mxu0 0.0
    %482 = vmatpush1.xpose.msra.mxu0 0.0
    %483 = vmatprep.subr.mxu0 0.0
    %484 = vmatpush1.xpose.msra.mxu0 0.0
    %485 = vmatprep.subr.mxu0 0.0
    %486 = vmatpush1.xpose.msra.mxu0 0.0
    %487 = vmatprep.subr.mxu0 0.0
    %488 = vmatpush1.xpose.msra.mxu0 0.0
    %489 = vmatprep.subr.mxu0 0.0
    %490 = vmatpush1.xpose.msra.mxu0 0.0
    %491 = vmatprep.subr.mxu0 0.0
    %492 = vmatpush1.xpose.msra.mxu0 0.0
    %493 = vmatprep.subr.mxu0 0.0
    %494 = vmatpush1.xpose.msra.mxu0 0.0
    %495 = vmatprep.subr.mxu0 0.0
    %496 = vmatpush1.xpose.msra.mxu0 0.0
    %497 = vmatprep.subr.mxu0 0.0
    %498 = vmatpush1.xpose.msra.mxu0 %v352
    %499 = vmatprep.subr.mxu0 0.0
    %500 = vmatpush1.xpose.msra.mxu0 %v349
    %501 = vmatprep.subr.mxu0 0.0
    %502 = vmatpush2.xpose.msra.mxu0 0.0
    %503 = vmatprep.subr.mxu0 0.0
    %504 = vmatpush2.xpose.msra.mxu0 0.0
    %505 = vmatprep.subr.mxu0 0.0
    %506 = vmatpush2.xpose.msra.mxu0 0.0
    %507 = vmatprep.subr.mxu0 0.0
    %508 = vmatpush2.xpose.msra.mxu0 0.0
    %509 = vmatprep.subr.mxu0 0.0
    %510 = vmatpush2.xpose.msra.mxu0 0.0
    %511 = vmatprep.subr.mxu0 0.0
    %512 = vmatpush2.xpose.msra.mxu0 0.0
    %513 = vmatprep.subr.mxu0 0.0
    %514 = vmatpush2.xpose.msra.mxu0 0.0
    %515 = vmatprep.subr.mxu0 0.0
    %516 = vmatpush2.xpose.msra.mxu0 0.0
    %517 = vmatprep.subr.mxu0 0.0
    %518 = vmatpush2.xpose.msra.mxu0 0.0
    %519 = vmatprep.subr.mxu0 0.0
    %520 = vmatpush2.xpose.msra.mxu0 0.0
    %521 = vmatprep.subr.mxu0 0.0
    %522 = vmatpush2.xpose.msra.mxu0 0.0
    %523 = vmatprep.subr.mxu0 0.0
    %524 = vmatpush2.xpose.msra.mxu0 0.0
    %525 = vmatprep.subr.mxu0 0.0
    %526 = vmatpush2.xpose.msra.mxu0 0.0
    %527 = vmatprep.subr.mxu0 0.0
    %528 = vmatpush2.xpose.msra.mxu0 0.0
    %529 = vmatprep.subr.mxu0 0.0
    %530 = vmatpush2.xpose.msra.mxu0 0.0
    %531 = vmatprep.subr.mxu0 0.0
    %532 = vmatpush2.xpose.msra.mxu0 0.0
    %533 = vmatprep.mubr.f32.mxu0 0.0
    %534 = vmatmul.mubr.f32.gmra.mxu0 %v464
    %v535 = vpop.f32.mrf.mxu0
    %v536 = vadd.f32 0.0, %v535
    %v537 = vpop.f32.mrf.mxu0
    %538 = vmatprep.mubr.f32.mxu0 0.0
    %539 = vmatmul.mubr.f32.gmra.mxu0 %v467
    %v540 = vpop.f32.mrf.mxu0
    %v541 = vadd.f32 0.0, %v540
    %v542 = vpop.f32.mrf.mxu0
    %543 = vdwg.mxu0
    %v544 = vsel %vm333, %v536, -1e+30
    %v545 = vsel %vm334, %v541, -1e+30
    %v546 = vsel %vm431, %v544, -inf
    %547 = vmax.xlane.f32.xlu0 %v546
    %v548 = vpop.xlane.xlu0 %547
    %v549 = vsel %vm431, %v545, -inf
    %550 = vmax.xlane.f32.xlu0 %v549
    %v551 = vpop.xlane.xlu0 %550
    %v552 = vsub.f32 %v544, %v548
    %v553 = vsub.f32 %v545, %v551
    %v554 = vmul.f32 %v552, 1.442695
    %v555 = vpow.pop %v554
    %v556 = vmul.f32 %v553, 1.442695
    %v557 = vpow.pop %v556
    %v558 = vsel %vm431, %v555, 0.0
    %559 = vadd.xlane.f32.xlu0 %v558
    %v560 = vpop.xlane.xlu0 %559
    %v561 = vsel %vm431, %v557, 0.0
    %562 = vadd.xlane.f32.xlu0 %v561
    %v563 = vpop.xlane.xlu0 %562
    %v564 = vrcp.pop %v560
    %v565 = vrcp.pop %v563
    %v566 = vmul.f32 %v555, %v564
    %v567 = vmul.f32 %v557, %v565
    %v568 = vmul.f32 %v315, %v460
    %v569 = vmul.f32 %v320, %v460
    %v571 = vsel %vm431, %v566, 0
    %v574 = vsel %vm431, %v567, 0
    %576 = vmatprep.subr.mxu0 0.0
    %577 = vmatpush1.msra.mxu0 0.0
    %578 = vmatprep.subr.mxu0 0.0
    %579 = vmatpush1.msra.mxu0 0.0
    %580 = vmatprep.subr.mxu0 0.0
    %581 = vmatpush1.msra.mxu0 0.0
    %582 = vmatprep.subr.mxu0 0.0
    %583 = vmatpush1.msra.mxu0 0.0
    %584 = vmatprep.subr.mxu0 0.0
    %585 = vmatpush1.msra.mxu0 0.0
    %586 = vmatprep.subr.mxu0 0.0
    %587 = vmatpush1.msra.mxu0 0.0
    %588 = vmatprep.subr.mxu0 0.0
    %589 = vmatpush1.msra.mxu0 0.0
    %590 = vmatprep.subr.mxu0 0.0
    %591 = vmatpush1.msra.mxu0 0.0
    %592 = vmatprep.subr.mxu0 0.0
    %593 = vmatpush1.msra.mxu0 0.0
    %594 = vmatprep.subr.mxu0 0.0
    %595 = vmatpush1.msra.mxu0 0.0
    %596 = vmatprep.subr.mxu0 0.0
    %597 = vmatpush1.msra.mxu0 0.0
    %598 = vmatprep.subr.mxu0 0.0
    %599 = vmatpush1.msra.mxu0 0.0
    %600 = vmatprep.subr.mxu0 0.0
    %601 = vmatpush1.msra.mxu0 0.0
    %602 = vmatprep.subr.mxu0 0.0
    %603 = vmatpush1.msra.mxu0 0.0
    %604 = vmatprep.subr.mxu0 0.0
    %605 = vmatpush1.msra.mxu0 %v569
    %606 = vmatprep.subr.mxu0 0.0
    %607 = vmatpush1.msra.mxu0 %v568
    %608 = vmatprep.subr.mxu0 0.0
    %609 = vmatpush2.msra.mxu0 0.0
    %610 = vmatprep.subr.mxu0 0.0
    %611 = vmatpush2.msra.mxu0 0.0
    %612 = vmatprep.subr.mxu0 0.0
    %613 = vmatpush2.msra.mxu0 0.0
    %614 = vmatprep.subr.mxu0 0.0
    %615 = vmatpush2.msra.mxu0 0.0
    %616 = vmatprep.subr.mxu0 0.0
    %617 = vmatpush2.msra.mxu0 0.0
    %618 = vmatprep.subr.mxu0 0.0
    %619 = vmatpush2.msra.mxu0 0.0
    %620 = vmatprep.subr.mxu0 0.0
    %621 = vmatpush2.msra.mxu0 0.0
    %622 = vmatprep.subr.mxu0 0.0
    %623 = vmatpush2.msra.mxu0 0.0
    %624 = vmatprep.subr.mxu0 0.0
    %625 = vmatpush2.msra.mxu0 0.0
    %626 = vmatprep.subr.mxu0 0.0
    %627 = vmatpush2.msra.mxu0 0.0
    %628 = vmatprep.subr.mxu0 0.0
    %629 = vmatpush2.msra.mxu0 0.0
    %630 = vmatprep.subr.mxu0 0.0
    %631 = vmatpush2.msra.mxu0 0.0
    %632 = vmatprep.subr.mxu0 0.0
    %633 = vmatpush2.msra.mxu0 0.0
    %634 = vmatprep.subr.mxu0 0.0
    %635 = vmatpush2.msra.mxu0 0.0
    %636 = vmatprep.subr.mxu0 0.0
    %637 = vmatpush2.msra.mxu0 0.0
    %638 = vmatprep.subr.mxu0 0.0
    %639 = vmatpush2.msra.mxu0 0.0
    %640 = vmatprep.mubr.f32.mxu0 0.0
    %641 = vmatmul.mubr.f32.gmra.mxu0 %v571
    %v642 = vpop.f32.mrf.mxu0
    %v643 = vadd.f32 0.0, %v642
    %v644 = vpop.f32.mrf.mxu0
    %645 = vmatprep.mubr.f32.mxu0 0.0
    %646 = vmatmul.mubr.f32.gmra.mxu0 %v574
    %v647 = vpop.f32.mrf.mxu0
    %v648 = vadd.f32 0.0, %v647
    %v649 = vpop.f32.mrf.mxu0
    %650 = vdwg.mxu0
    %v652 = vsel %vm431, %v452, 0
    %v655 = vsel %vm431, %v453, 0
    %657 = vmatprep.subr.mxu0 0.0
    %658 = vmatpush1.msra.mxu0 0.0
    %659 = vmatprep.subr.mxu0 0.0
    %660 = vmatpush1.msra.mxu0 0.0
    %661 = vmatprep.subr.mxu0 0.0
    %662 = vmatpush1.msra.mxu0 0.0
    %663 = vmatprep.subr.mxu0 0.0
    %664 = vmatpush1.msra.mxu0 0.0
    %665 = vmatprep.subr.mxu0 0.0
    %666 = vmatpush1.msra.mxu0 0.0
    %667 = vmatprep.subr.mxu0 0.0
    %668 = vmatpush1.msra.mxu0 0.0
    %669 = vmatprep.subr.mxu0 0.0
    %670 = vmatpush1.msra.mxu0 0.0
    %671 = vmatprep.subr.mxu0 0.0
    %672 = vmatpush1.msra.mxu0 0.0
    %673 = vmatprep.subr.mxu0 0.0
    %674 = vmatpush1.msra.mxu0 0.0
    %675 = vmatprep.subr.mxu0 0.0
    %676 = vmatpush1.msra.mxu0 0.0
    %677 = vmatprep.subr.mxu0 0.0
    %678 = vmatpush1.msra.mxu0 0.0
    %679 = vmatprep.subr.mxu0 0.0
    %680 = vmatpush1.msra.mxu0 0.0
    %681 = vmatprep.subr.mxu0 0.0
    %682 = vmatpush1.msra.mxu0 0.0
    %683 = vmatprep.subr.mxu0 0.0
    %684 = vmatpush1.msra.mxu0 0.0
    %685 = vmatprep.subr.mxu0 0.0
    %686 = vmatpush1.msra.mxu0 %v455
    %687 = vmatprep.subr.mxu0 0.0
    %688 = vmatpush1.msra.mxu0 %v454
    %689 = vmatprep.subr.mxu0 0.0
    %690 = vmatpush2.msra.mxu0 0.0
    %691 = vmatprep.subr.mxu0 0.0
    %692 = vmatpush2.msra.mxu0 0.0
    %693 = vmatprep.subr.mxu0 0.0
    %694 = vmatpush2.msra.mxu0 0.0
    %695 = vmatprep.subr.mxu0 0.0
    %696 = vmatpush2.msra.mxu0 0.0
    %697 = vmatprep.subr.mxu0 0.0
    %698 = vmatpush2.msra.mxu0 0.0
    %699 = vmatprep.subr.mxu0 0.0
    %700 = vmatpush2.msra.mxu0 0.0
    %701 = vmatprep.subr.mxu0 0.0
    %702 = vmatpush2.msra.mxu0 0.0
    %703 = vmatprep.subr.mxu0 0.0
    %704 = vmatpush2.msra.mxu0 0.0
    %705 = vmatprep.subr.mxu0 0.0
    %706 = vmatpush2.msra.mxu0 0.0
    %707 = vmatprep.subr.mxu0 0.0
    %708 = vmatpush2.msra.mxu0 0.0
    %709 = vmatprep.subr.mxu0 0.0
    %710 = vmatpush2.msra.mxu0 0.0
    %711 = vmatprep.subr.mxu0 0.0
    %712 = vmatpush2.msra.mxu0 0.0
    %713 = vmatprep.subr.mxu0 0.0
    %714 = vmatpush2.msra.mxu0 0.0
    %715 = vmatprep.subr.mxu0 0.0
    %716 = vmatpush2.msra.mxu0 0.0
    %717 = vmatprep.subr.mxu0 0.0
    %718 = vmatpush2.msra.mxu0 0.0
    %719 = vmatprep.subr.mxu0 0.0
    %720 = vmatpush2.msra.mxu0 0.0
    %721 = vmatprep.mubr.f32.mxu0 0.0
    %722 = vmatmul.mubr.f32.gmra.mxu0 %v652
    %v723 = vpop.f32.mrf.mxu0
    %v724 = vadd.f32 %v643, %v723
    %v725 = vpop.f32.mrf.mxu0
    %726 = vmatprep.mubr.f32.mxu0 0.0
    %727 = vmatmul.mubr.f32.gmra.mxu0 %v655
    %v728 = vpop.f32.mrf.mxu0
    %v729 = vadd.f32 %v648, %v728
    %v730 = vpop.f32.mrf.mxu0
    %731 = vdwg.mxu0
    %vm732 = vcmp.ge.s32.totalorder %v326, 16
    %vm733 = vcmp.lt.s32.totalorder %v326, 24
    %vm734 = vmand %vm732, %vm733
    %v735 = vsel %vm734, 1, 0
    %v736 = vcvt.s32.f32 %v735
    %v737 = vmul.f32 %v323, %v736
    %v738 = vmul.f32 %v324, %v736
    %v740 = vsel %vm49, %v737, 0
    %v743 = vsel %vm49, %v738, 0
    %745 = vmatprep.subr.mxu0 0.0
    %746 = vmatpush1.xpose.msra.mxu0 0.0
    %747 = vmatprep.subr.mxu0 0.0
    %748 = vmatpush1.xpose.msra.mxu0 0.0
    %749 = vmatprep.subr.mxu0 0.0
    %750 = vmatpush1.xpose.msra.mxu0 0.0
    %751 = vmatprep.subr.mxu0 0.0
    %752 = vmatpush1.xpose.msra.mxu0 0.0
    %753 = vmatprep.subr.mxu0 0.0
    %754 = vmatpush1.xpose.msra.mxu0 0.0
    %755 = vmatprep.subr.mxu0 0.0
    %756 = vmatpush1.xpose.msra.mxu0 0.0
    %757 = vmatprep.subr.mxu0 0.0
    %758 = vmatpush1.xpose.msra.mxu0 0.0
    %759 = vmatprep.subr.mxu0 0.0
    %760 = vmatpush1.xpose.msra.mxu0 0.0
    %761 = vmatprep.subr.mxu0 0.0
    %762 = vmatpush1.xpose.msra.mxu0 0.0
    %763 = vmatprep.subr.mxu0 0.0
    %764 = vmatpush1.xpose.msra.mxu0 0.0
    %765 = vmatprep.subr.mxu0 0.0
    %766 = vmatpush1.xpose.msra.mxu0 0.0
    %767 = vmatprep.subr.mxu0 0.0
    %768 = vmatpush1.xpose.msra.mxu0 0.0
    %769 = vmatprep.subr.mxu0 0.0
    %770 = vmatpush1.xpose.msra.mxu0 0.0
    %771 = vmatprep.subr.mxu0 0.0
    %772 = vmatpush1.xpose.msra.mxu0 0.0
    %773 = vmatprep.subr.mxu0 0.0
    %774 = vmatpush1.xpose.msra.mxu0 %v352
    %775 = vmatprep.subr.mxu0 0.0
    %776 = vmatpush1.xpose.msra.mxu0 %v349
    %777 = vmatprep.subr.mxu0 0.0
    %778 = vmatpush2.xpose.msra.mxu0 0.0
    %779 = vmatprep.subr.mxu0 0.0
    %780 = vmatpush2.xpose.msra.mxu0 0.0
    %781 = vmatprep.subr.mxu0 0.0
    %782 = vmatpush2.xpose.msra.mxu0 0.0
    %783 = vmatprep.subr.mxu0 0.0
    %784 = vmatpush2.xpose.msra.mxu0 0.0
    %785 = vmatprep.subr.mxu0 0.0
    %786 = vmatpush2.xpose.msra.mxu0 0.0
    %787 = vmatprep.subr.mxu0 0.0
    %788 = vmatpush2.xpose.msra.mxu0 0.0
    %789 = vmatprep.subr.mxu0 0.0
    %790 = vmatpush2.xpose.msra.mxu0 0.0
    %791 = vmatprep.subr.mxu0 0.0
    %792 = vmatpush2.xpose.msra.mxu0 0.0
    %793 = vmatprep.subr.mxu0 0.0
    %794 = vmatpush2.xpose.msra.mxu0 0.0
    %795 = vmatprep.subr.mxu0 0.0
    %796 = vmatpush2.xpose.msra.mxu0 0.0
    %797 = vmatprep.subr.mxu0 0.0
    %798 = vmatpush2.xpose.msra.mxu0 0.0
    %799 = vmatprep.subr.mxu0 0.0
    %800 = vmatpush2.xpose.msra.mxu0 0.0
    %801 = vmatprep.subr.mxu0 0.0
    %802 = vmatpush2.xpose.msra.mxu0 0.0
    %803 = vmatprep.subr.mxu0 0.0
    %804 = vmatpush2.xpose.msra.mxu0 0.0
    %805 = vmatprep.subr.mxu0 0.0
    %806 = vmatpush2.xpose.msra.mxu0 0.0
    %807 = vmatprep.subr.mxu0 0.0
    %808 = vmatpush2.xpose.msra.mxu0 0.0
    %809 = vmatprep.mubr.f32.mxu0 0.0
    %810 = vmatmul.mubr.f32.gmra.mxu0 %v740
    %v811 = vpop.f32.mrf.mxu0
    %v812 = vadd.f32 0.0, %v811
    %v813 = vpop.f32.mrf.mxu0
    %814 = vmatprep.mubr.f32.mxu0 0.0
    %815 = vmatmul.mubr.f32.gmra.mxu0 %v743
    %v816 = vpop.f32.mrf.mxu0
    %v817 = vadd.f32 0.0, %v816
    %v818 = vpop.f32.mrf.mxu0
    %819 = vdwg.mxu0
    %v820 = vsel %vm333, %v812, -1e+30
    %v821 = vsel %vm334, %v817, -1e+30
    %v822 = vsel %vm431, %v820, -inf
    %823 = vmax.xlane.f32.xlu0 %v822
    %v824 = vpop.xlane.xlu0 %823
    %v825 = vsel %vm431, %v821, -inf
    %826 = vmax.xlane.f32.xlu0 %v825
    %v827 = vpop.xlane.xlu0 %826
    %v828 = vsub.f32 %v820, %v824
    %v829 = vsub.f32 %v821, %v827
    %v830 = vmul.f32 %v828, 1.442695
    %v831 = vpow.pop %v830
    %v832 = vmul.f32 %v829, 1.442695
    %v833 = vpow.pop %v832
    %v834 = vsel %vm431, %v831, 0.0
    %835 = vadd.xlane.f32.xlu0 %v834
    %v836 = vpop.xlane.xlu0 %835
    %v837 = vsel %vm431, %v833, 0.0
    %838 = vadd.xlane.f32.xlu0 %v837
    %v839 = vpop.xlane.xlu0 %838
    %v840 = vrcp.pop %v836
    %v841 = vrcp.pop %v839
    %v842 = vmul.f32 %v831, %v840
    %v843 = vmul.f32 %v833, %v841
    %v844 = vmul.f32 %v315, %v736
    %v845 = vmul.f32 %v320, %v736
    %v847 = vsel %vm431, %v842, 0
    %v850 = vsel %vm431, %v843, 0
    %852 = vmatprep.subr.mxu0 0.0
    %853 = vmatpush1.msra.mxu0 0.0
    %854 = vmatprep.subr.mxu0 0.0
    %855 = vmatpush1.msra.mxu0 0.0
    %856 = vmatprep.subr.mxu0 0.0
    %857 = vmatpush1.msra.mxu0 0.0
    %858 = vmatprep.subr.mxu0 0.0
    %859 = vmatpush1.msra.mxu0 0.0
    %860 = vmatprep.subr.mxu0 0.0
    %861 = vmatpush1.msra.mxu0 0.0
    %862 = vmatprep.subr.mxu0 0.0
    %863 = vmatpush1.msra.mxu0 0.0
    %864 = vmatprep.subr.mxu0 0.0
    %865 = vmatpush1.msra.mxu0 0.0
    %866 = vmatprep.subr.mxu0 0.0
    %867 = vmatpush1.msra.mxu0 0.0
    %868 = vmatprep.subr.mxu0 0.0
    %869 = vmatpush1.msra.mxu0 0.0
    %870 = vmatprep.subr.mxu0 0.0
    %871 = vmatpush1.msra.mxu0 0.0
    %872 = vmatprep.subr.mxu0 0.0
    %873 = vmatpush1.msra.mxu0 0.0
    %874 = vmatprep.subr.mxu0 0.0
    %875 = vmatpush1.msra.mxu0 0.0
    %876 = vmatprep.subr.mxu0 0.0
    %877 = vmatpush1.msra.mxu0 0.0
    %878 = vmatprep.subr.mxu0 0.0
    %879 = vmatpush1.msra.mxu0 0.0
    %880 = vmatprep.subr.mxu0 0.0
    %881 = vmatpush1.msra.mxu0 %v845
    %882 = vmatprep.subr.mxu0 0.0
    %883 = vmatpush1.msra.mxu0 %v844
    %884 = vmatprep.subr.mxu0 0.0
    %885 = vmatpush2.msra.mxu0 0.0
    %886 = vmatprep.subr.mxu0 0.0
    %887 = vmatpush2.msra.mxu0 0.0
    %888 = vmatprep.subr.mxu0 0.0
    %889 = vmatpush2.msra.mxu0 0.0
    %890 = vmatprep.subr.mxu0 0.0
    %891 = vmatpush2.msra.mxu0 0.0
    %892 = vmatprep.subr.mxu0 0.0
    %893 = vmatpush2.msra.mxu0 0.0
    %894 = vmatprep.subr.mxu0 0.0
    %895 = vmatpush2.msra.mxu0 0.0
    %896 = vmatprep.subr.mxu0 0.0
    %897 = vmatpush2.msra.mxu0 0.0
    %898 = vmatprep.subr.mxu0 0.0
    %899 = vmatpush2.msra.mxu0 0.0
    %900 = vmatprep.subr.mxu0 0.0
    %901 = vmatpush2.msra.mxu0 0.0
    %902 = vmatprep.subr.mxu0 0.0
    %903 = vmatpush2.msra.mxu0 0.0
    %904 = vmatprep.subr.mxu0 0.0
    %905 = vmatpush2.msra.mxu0 0.0
    %906 = vmatprep.subr.mxu0 0.0
    %907 = vmatpush2.msra.mxu0 0.0
    %908 = vmatprep.subr.mxu0 0.0
    %909 = vmatpush2.msra.mxu0 0.0
    %910 = vmatprep.subr.mxu0 0.0
    %911 = vmatpush2.msra.mxu0 0.0
    %912 = vmatprep.subr.mxu0 0.0
    %913 = vmatpush2.msra.mxu0 0.0
    %914 = vmatprep.subr.mxu0 0.0
    %915 = vmatpush2.msra.mxu0 0.0
    %916 = vmatprep.mubr.f32.mxu0 0.0
    %917 = vmatmul.mubr.f32.gmra.mxu0 %v847
    %v918 = vpop.f32.mrf.mxu0
    %v919 = vadd.f32 0.0, %v918
    %v920 = vpop.f32.mrf.mxu0
    %921 = vmatprep.mubr.f32.mxu0 0.0
    %922 = vmatmul.mubr.f32.gmra.mxu0 %v850
    %v923 = vpop.f32.mrf.mxu0
    %v924 = vadd.f32 0.0, %v923
    %v925 = vpop.f32.mrf.mxu0
    %926 = vdwg.mxu0
    %v927 = vadd.f32 %v724, %v919
    %v928 = vadd.f32 %v729, %v924
    %vm929 = vcmp.ge.s32.totalorder %v326, 24
    %vm930 = vcmp.lt.s32.totalorder %v326, 32
    %vm931 = vmand %vm929, %vm930
    %v932 = vsel %vm931, 1, 0
    %v933 = vcvt.s32.f32 %v932
    %v934 = vmul.f32 %v323, %v933
    %v935 = vmul.f32 %v324, %v933
    %v937 = vsel %vm49, %v934, 0
    %v940 = vsel %vm49, %v935, 0
    %942 = vmatprep.subr.mxu0 0.0
    %943 = vmatpush1.xpose.msra.mxu0 0.0
    %944 = vmatprep.subr.mxu0 0.0
    %945 = vmatpush1.xpose.msra.mxu0 0.0
    %946 = vmatprep.subr.mxu0 0.0
    %947 = vmatpush1.xpose.msra.mxu0 0.0
    %948 = vmatprep.subr.mxu0 0.0
    %949 = vmatpush1.xpose.msra.mxu0 0.0
    %950 = vmatprep.subr.mxu0 0.0
    %951 = vmatpush1.xpose.msra.mxu0 0.0
    %952 = vmatprep.subr.mxu0 0.0
    %953 = vmatpush1.xpose.msra.mxu0 0.0
    %954 = vmatprep.subr.mxu0 0.0
    %955 = vmatpush1.xpose.msra.mxu0 0.0
    %956 = vmatprep.subr.mxu0 0.0
    %957 = vmatpush1.xpose.msra.mxu0 0.0
    %958 = vmatprep.subr.mxu0 0.0
    %959 = vmatpush1.xpose.msra.mxu0 0.0
    %960 = vmatprep.subr.mxu0 0.0
    %961 = vmatpush1.xpose.msra.mxu0 0.0
    %962 = vmatprep.subr.mxu0 0.0
    %963 = vmatpush1.xpose.msra.mxu0 0.0
    %964 = vmatprep.subr.mxu0 0.0
    %965 = vmatpush1.xpose.msra.mxu0 0.0
    %966 = vmatprep.subr.mxu0 0.0
    %967 = vmatpush1.xpose.msra.mxu0 0.0
    %968 = vmatprep.subr.mxu0 0.0
    %969 = vmatpush1.xpose.msra.mxu0 0.0
    %970 = vmatprep.subr.mxu0 0.0
    %971 = vmatpush1.xpose.msra.mxu0 %v352
    %972 = vmatprep.subr.mxu0 0.0
    %973 = vmatpush1.xpose.msra.mxu0 %v349
    %974 = vmatprep.subr.mxu0 0.0
    %975 = vmatpush2.xpose.msra.mxu0 0.0
    %976 = vmatprep.subr.mxu0 0.0
    %977 = vmatpush2.xpose.msra.mxu0 0.0
    %978 = vmatprep.subr.mxu0 0.0
    %979 = vmatpush2.xpose.msra.mxu0 0.0
    %980 = vmatprep.subr.mxu0 0.0
    %981 = vmatpush2.xpose.msra.mxu0 0.0
    %982 = vmatprep.subr.mxu0 0.0
    %983 = vmatpush2.xpose.msra.mxu0 0.0
    %984 = vmatprep.subr.mxu0 0.0
    %985 = vmatpush2.xpose.msra.mxu0 0.0
    %986 = vmatprep.subr.mxu0 0.0
    %987 = vmatpush2.xpose.msra.mxu0 0.0
    %988 = vmatprep.subr.mxu0 0.0
    %989 = vmatpush2.xpose.msra.mxu0 0.0
    %990 = vmatprep.subr.mxu0 0.0
    %991 = vmatpush2.xpose.msra.mxu0 0.0
    %992 = vmatprep.subr.mxu0 0.0
    %993 = vmatpush2.xpose.msra.mxu0 0.0
    %994 = vmatprep.subr.mxu0 0.0
    %995 = vmatpush2.xpose.msra.mxu0 0.0
    %996 = vmatprep.subr.mxu0 0.0
    %997 = vmatpush2.xpose.msra.mxu0 0.0
    %998 = vmatprep.subr.mxu0 0.0
    %999 = vmatpush2.xpose.msra.mxu0 0.0
    %1000 = vmatprep.subr.mxu0 0.0
    %1001 = vmatpush2.xpose.msra.mxu0 0.0
    %1002 = vmatprep.subr.mxu0 0.0
    %1003 = vmatpush2.xpose.msra.mxu0 0.0
    %1004 = vmatprep.subr.mxu0 0.0
    %1005 = vmatpush2.xpose.msra.mxu0 0.0
    %1006 = vmatprep.mubr.f32.mxu0 0.0
    %1007 = vmatmul.mubr.f32.gmra.mxu0 %v937
    %v1008 = vpop.f32.mrf.mxu0
    %v1009 = vadd.f32 0.0, %v1008
    %v1010 = vpop.f32.mrf.mxu0
    %1011 = vmatprep.mubr.f32.mxu0 0.0
    %1012 = vmatmul.mubr.f32.gmra.mxu0 %v940
    %v1013 = vpop.f32.mrf.mxu0
    %v1014 = vadd.f32 0.0, %v1013
    %v1015 = vpop.f32.mrf.mxu0
    %1016 = vdwg.mxu0
    %v1017 = vsel %vm333, %v1009, -1e+30
    %v1018 = vsel %vm334, %v1014, -1e+30
    %v1019 = vsel %vm431, %v1017, -inf
    %1020 = vmax.xlane.f32.xlu0 %v1019
    %v1021 = vpop.xlane.xlu0 %1020
    %v1022 = vsel %vm431, %v1018, -inf
    %1023 = vmax.xlane.f32.xlu0 %v1022
    %v1024 = vpop.xlane.xlu0 %1023
    %v1025 = vsub.f32 %v1017, %v1021
    %v1026 = vsub.f32 %v1018, %v1024
    %v1027 = vmul.f32 %v1025, 1.442695
    %v1028 = vpow.pop %v1027
    %v1029 = vmul.f32 %v1026, 1.442695
    %v1030 = vpow.pop %v1029
    %v1031 = vsel %vm431, %v1028, 0.0
    %1032 = vadd.xlane.f32.xlu0 %v1031
    %v1033 = vpop.xlane.xlu0 %1032
    %v1034 = vsel %vm431, %v1030, 0.0
    %1035 = vadd.xlane.f32.xlu0 %v1034
    %v1036 = vpop.xlane.xlu0 %1035
    %v1037 = vrcp.pop %v1033
    %v1038 = vrcp.pop %v1036
    %v1039 = vmul.f32 %v1028, %v1037
    %v1040 = vmul.f32 %v1030, %v1038
    %v1041 = vmul.f32 %v315, %v933
    %v1042 = vmul.f32 %v320, %v933
    %v1044 = vsel %vm431, %v1039, 0
    %v1047 = vsel %vm431, %v1040, 0
    %1049 = vmatprep.subr.mxu0 0.0
    %1050 = vmatpush1.msra.mxu0 0.0
    %1051 = vmatprep.subr.mxu0 0.0
    %1052 = vmatpush1.msra.mxu0 0.0
    %1053 = vmatprep.subr.mxu0 0.0
    %1054 = vmatpush1.msra.mxu0 0.0
    %1055 = vmatprep.subr.mxu0 0.0
    %1056 = vmatpush1.msra.mxu0 0.0
    %1057 = vmatprep.subr.mxu0 0.0
    %1058 = vmatpush1.msra.mxu0 0.0
    %1059 = vmatprep.subr.mxu0 0.0
    %1060 = vmatpush1.msra.mxu0 0.0
    %1061 = vmatprep.subr.mxu0 0.0
    %1062 = vmatpush1.msra.mxu0 0.0
    %1063 = vmatprep.subr.mxu0 0.0
    %1064 = vmatpush1.msra.mxu0 0.0
    %1065 = vmatprep.subr.mxu0 0.0
    %1066 = vmatpush1.msra.mxu0 0.0
    %1067 = vmatprep.subr.mxu0 0.0
    %1068 = vmatpush1.msra.mxu0 0.0
    %1069 = vmatprep.subr.mxu0 0.0
    %1070 = vmatpush1.msra.mxu0 0.0
    %1071 = vmatprep.subr.mxu0 0.0
    %1072 = vmatpush1.msra.mxu0 0.0
    %1073 = vmatprep.subr.mxu0 0.0
    %1074 = vmatpush1.msra.mxu0 0.0
    %1075 = vmatprep.subr.mxu0 0.0
    %1076 = vmatpush1.msra.mxu0 0.0
    %1077 = vmatprep.subr.mxu0 0.0
    %1078 = vmatpush1.msra.mxu0 %v1042
    %1079 = vmatprep.subr.mxu0 0.0
    %1080 = vmatpush1.msra.mxu0 %v1041
    %1081 = vmatprep.subr.mxu0 0.0
    %1082 = vmatpush2.msra.mxu0 0.0
    %1083 = vmatprep.subr.mxu0 0.0
    %1084 = vmatpush2.msra.mxu0 0.0
    %1085 = vmatprep.subr.mxu0 0.0
    %1086 = vmatpush2.msra.mxu0 0.0
    %1087 = vmatprep.subr.mxu0 0.0
    %1088 = vmatpush2.msra.mxu0 0.0
    %1089 = vmatprep.subr.mxu0 0.0
    %1090 = vmatpush2.msra.mxu0 0.0
    %1091 = vmatprep.subr.mxu0 0.0
    %1092 = vmatpush2.msra.mxu0 0.0
    %1093 = vmatprep.subr.mxu0 0.0
    %1094 = vmatpush2.msra.mxu0 0.0
    %1095 = vmatprep.subr.mxu0 0.0
    %1096 = vmatpush2.msra.mxu0 0.0
    %1097 = vmatprep.subr.mxu0 0.0
    %1098 = vmatpush2.msra.mxu0 0.0
    %1099 = vmatprep.subr.mxu0 0.0
    %1100 = vmatpush2.msra.mxu0 0.0
    %1101 = vmatprep.subr.mxu0 0.0
    %1102 = vmatpush2.msra.mxu0 0.0
    %1103 = vmatprep.subr.mxu0 0.0
    %1104 = vmatpush2.msra.mxu0 0.0
    %1105 = vmatprep.subr.mxu0 0.0
    %1106 = vmatpush2.msra.mxu0 0.0
    %1107 = vmatprep.subr.mxu0 0.0
    %1108 = vmatpush2.msra.mxu0 0.0
    %1109 = vmatprep.subr.mxu0 0.0
    %1110 = vmatpush2.msra.mxu0 0.0
    %1111 = vmatprep.subr.mxu0 0.0
    %1112 = vmatpush2.msra.mxu0 0.0
    %1113 = vmatprep.mubr.f32.mxu0 0.0
    %1114 = vmatmul.mubr.f32.gmra.mxu0 %v1044
    %v1115 = vpop.f32.mrf.mxu0
    %v1116 = vadd.f32 0.0, %v1115
    %v1117 = vpop.f32.mrf.mxu0
    %1118 = vmatprep.mubr.f32.mxu0 0.0
    %1119 = vmatmul.mubr.f32.gmra.mxu0 %v1047
    %v1120 = vpop.f32.mrf.mxu0
    %v1121 = vadd.f32 0.0, %v1120
    %v1122 = vpop.f32.mrf.mxu0
    %1123 = vdwg.mxu0
    %v1124 = vadd.f32 %v927, %v1116
    %v1125 = vadd.f32 %v928, %v1121
    %v1126 = vlaneseq
    %v1127 = vshrl.u32 %v1126, 7
    %v1128 = vsub.s32 3, %v1127
    %v1129 = vrot.slane %v43, %v1128
    %1130 = vrot.lane.b32.xlu0 %v27, 32
    %v1131 = vpop.permute.xlu0 %1130
    %1132 = vrot.lane.b32.xlu0 %v28, 32
    %v1133 = vpop.permute.xlu0 %1132
    %1134 = vrot.lane.b32.xlu0 %v29, 32
    %v1135 = vpop.permute.xlu0 %1134
    %1136 = vrot.lane.b32.xlu0 %v30, 32
    %v1137 = vpop.permute.xlu0 %1136
    %v1143 = vsel %vm49, %v1124, 0
    %v1146 = vsel %vm49, %v1125, 0
    %1148 = vmatprep.subr.mxu0 0.0
    %1149 = vmatpush1.msra.mxu0 0.0
    %1150 = vmatprep.subr.mxu0 0.0
    %1151 = vmatpush1.msra.mxu0 0.0
    %1152 = vmatprep.subr.mxu0 0.0
    %1153 = vmatpush1.msra.mxu0 0.0
    %1154 = vmatprep.subr.mxu0 0.0
    %1155 = vmatpush1.msra.mxu0 0.0
    %1156 = vmatprep.subr.mxu0 0.0
    %1157 = vmatpush1.msra.mxu0 0.0
    %1158 = vmatprep.subr.mxu0 0.0
    %1159 = vmatpush1.msra.mxu0 0.0
    %1160 = vmatprep.subr.mxu0 0.0
    %1161 = vmatpush1.msra.mxu0 0.0
    %1162 = vmatprep.subr.mxu0 0.0
    %1163 = vmatpush1.msra.mxu0 0.0
    %1164 = vmatprep.subr.mxu0 0.0
    %1165 = vmatpush1.msra.mxu0 0.0
    %1166 = vmatprep.subr.mxu0 0.0
    %1167 = vmatpush1.msra.mxu0 0.0
    %1168 = vmatprep.subr.mxu0 0.0
    %1169 = vmatpush1.msra.mxu0 0.0
    %1170 = vmatprep.subr.mxu0 0.0
    %1171 = vmatpush1.msra.mxu0 0.0
    %1172 = vmatprep.subr.mxu0 0.0
    %1173 = vmatpush1.msra.mxu0 %v1137
    %1174 = vmatprep.subr.mxu0 0.0
    %1175 = vmatpush1.msra.mxu0 %v1135
    %1176 = vmatprep.subr.mxu0 0.0
    %1177 = vmatpush1.msra.mxu0 %v1133
    %1178 = vmatprep.subr.mxu0 0.0
    %1179 = vmatpush1.msra.mxu0 %v1131
    %1180 = vmatprep.subr.mxu0 0.0
    %1181 = vmatpush2.msra.mxu0 0.0
    %1182 = vmatprep.subr.mxu0 0.0
    %1183 = vmatpush2.msra.mxu0 0.0
    %1184 = vmatprep.subr.mxu0 0.0
    %1185 = vmatpush2.msra.mxu0 0.0
    %1186 = vmatprep.subr.mxu0 0.0
    %1187 = vmatpush2.msra.mxu0 0.0
    %1188 = vmatprep.subr.mxu0 0.0
    %1189 = vmatpush2.msra.mxu0 0.0
    %1190 = vmatprep.subr.mxu0 0.0
    %1191 = vmatpush2.msra.mxu0 0.0
    %1192 = vmatprep.subr.mxu0 0.0
    %1193 = vmatpush2.msra.mxu0 0.0
    %1194 = vmatprep.subr.mxu0 0.0
    %1195 = vmatpush2.msra.mxu0 0.0
    %1196 = vmatprep.subr.mxu0 0.0
    %1197 = vmatpush2.msra.mxu0 0.0
    %1198 = vmatprep.subr.mxu0 0.0
    %1199 = vmatpush2.msra.mxu0 0.0
    %1200 = vmatprep.subr.mxu0 0.0
    %1201 = vmatpush2.msra.mxu0 0.0
    %1202 = vmatprep.subr.mxu0 0.0
    %1203 = vmatpush2.msra.mxu0 0.0
    %1204 = vmatprep.subr.mxu0 0.0
    %1205 = vmatpush2.msra.mxu0 0.0
    %1206 = vmatprep.subr.mxu0 0.0
    %1207 = vmatpush2.msra.mxu0 0.0
    %1208 = vmatprep.subr.mxu0 0.0
    %1209 = vmatpush2.msra.mxu0 0.0
    %1210 = vmatprep.subr.mxu0 0.0
    %1211 = vmatpush2.msra.mxu0 0.0
    %1212 = vmatprep.mubr.f32.mxu0 0.0
    %1213 = vmatmul.mubr.f32.gmra.mxu0 %v1143
    %v1214 = vpop.f32.mrf.mxu0
    %v1215 = vadd.f32 %v1129, %v1214
    %v1216 = vpop.f32.mrf.mxu0
    %1217 = vmatprep.mubr.f32.mxu0 0.0
    %1218 = vmatmul.mubr.f32.gmra.mxu0 %v1146
    %v1219 = vpop.f32.mrf.mxu0
    %v1220 = vadd.f32 %v1129, %v1219
    %v1221 = vpop.f32.mrf.mxu0
    %1222 = vdwg.mxu0
    %v1223 = vadd.f32 %v21, %v1215
    %v1224 = vadd.f32 %v22, %v1220
    %v1225 = vsel %vm49, %v1223, 0.0
    %1226 = vadd.xlane.f32.xlu0 %v1225
    %v1227 = vpop.xlane.xlu0 %1226
    %v1228 = vsel %vm49, %v1224, 0.0
    %1229 = vadd.xlane.f32.xlu0 %v1228
    %v1230 = vpop.xlane.xlu0 %1229
    %v1231 = vrcp.pop 32.0
    %v1232 = vmul.f32 %v1227, %v1231
    %v1233 = vmul.f32 %v1230, %v1231
    %v1234 = vsub.f32 %v1223, %v1232
    %v1235 = vsub.f32 %v1224, %v1233
    %v1236 = vmul.f32 %v1234, %v1234
    %v1237 = vmul.f32 %v1235, %v1235
    %v1238 = vsel %vm49, %v1236, 0.0
    %1239 = vadd.xlane.f32.xlu0 %v1238
    %v1240 = vpop.xlane.xlu0 %1239
    %v1241 = vsel %vm49, %v1237, 0.0
    %1242 = vadd.xlane.f32.xlu0 %v1241
    %v1243 = vpop.xlane.xlu0 %1242
    %v1244 = vmul.f32 %v1240, %v1231
    %v1245 = vmul.f32 %v1243, %v1231
    %v1246 = vadd.f32 %v1244, 1e-05
    %v1247 = vadd.f32 %v1245, 1e-05
    %v1248 = vrsqrt.pop %v1246
    %v1249 = vrsqrt.pop %v1247
    %v1250 = vmul.f32 %v1234, %v1248
    %v1251 = vmul.f32 %v1235, %v1249
    %v1252 = vlaneseq
    %v1253 = vshrl.u32 %v1252, 7
    %v1254 = vsub.s32 4, %v1253
    %v1255 = vrot.slane %v43, %v1254
    %v1256 = vmul.f32 %v1250, %v1255
    %v1257 = vmul.f32 %v1251, %v1255
    %v1258 = vlaneseq
    %v1259 = vshrl.u32 %v1258, 7
    %v1260 = vsub.s32 5, %v1259
    %v1261 = vrot.slane %v43, %v1260
    %v1262 = vadd.f32 %v1256, %v1261
    %v1263 = vadd.f32 %v1257, %v1261
    %v1264 = vlaneseq
    %v1265 = vshrl.u32 %v1264, 7
    %v1266 = vsub.s32 1, %v1265
    %v1267 = vrot.slane %v44, %v1266
    %v1269 = vsel %vm49, %v1262, 0
    %v1272 = vsel %vm49, %v1263, 0
    %1274 = vmatprep.subr.mxu0 0.0
    %1275 = vmatpush1.msra.mxu0 0.0
    %1276 = vmatprep.subr.mxu0 0.0
    %1277 = vmatpush1.msra.mxu0 0.0
    %1278 = vmatprep.subr.mxu0 0.0
    %1279 = vmatpush1.msra.mxu0 0.0
    %1280 = vmatprep.subr.mxu0 0.0
    %1281 = vmatpush1.msra.mxu0 0.0
    %1282 = vmatprep.subr.mxu0 0.0
    %1283 = vmatpush1.msra.mxu0 0.0
    %1284 = vmatprep.subr.mxu0 0.0
    %1285 = vmatpush1.msra.mxu0 0.0
    %1286 = vmatprep.subr.mxu0 0.0
    %1287 = vmatpush1.msra.mxu0 0.0
    %1288 = vmatprep.subr.mxu0 0.0
    %1289 = vmatpush1.msra.mxu0 0.0
    %1290 = vmatprep.subr.mxu0 0.0
    %1291 = vmatpush1.msra.mxu0 0.0
    %1292 = vmatprep.subr.mxu0 0.0
    %1293 = vmatpush1.msra.mxu0 0.0
    %1294 = vmatprep.subr.mxu0 0.0
    %1295 = vmatpush1.msra.mxu0 0.0
    %1296 = vmatprep.subr.mxu0 0.0
    %1297 = vmatpush1.msra.mxu0 0.0
    %1298 = vmatprep.subr.mxu0 0.0
    %1299 = vmatpush1.msra.mxu0 %v34
    %1300 = vmatprep.subr.mxu0 0.0
    %1301 = vmatpush1.msra.mxu0 %v33
    %1302 = vmatprep.subr.mxu0 0.0
    %1303 = vmatpush1.msra.mxu0 %v32
    %1304 = vmatprep.subr.mxu0 0.0
    %1305 = vmatpush1.msra.mxu0 %v31
    %1306 = vmatprep.subr.mxu0 0.0
    %1307 = vmatpush2.msra.mxu0 0.0
    %1308 = vmatprep.subr.mxu0 0.0
    %1309 = vmatpush2.msra.mxu0 0.0
    %1310 = vmatprep.subr.mxu0 0.0
    %1311 = vmatpush2.msra.mxu0 0.0
    %1312 = vmatprep.subr.mxu0 0.0
    %1313 = vmatpush2.msra.mxu0 0.0
    %1314 = vmatprep.subr.mxu0 0.0
    %1315 = vmatpush2.msra.mxu0 0.0
    %1316 = vmatprep.subr.mxu0 0.0
    %1317 = vmatpush2.msra.mxu0 0.0
    %1318 = vmatprep.subr.mxu0 0.0
    %1319 = vmatpush2.msra.mxu0 0.0
    %1320 = vmatprep.subr.mxu0 0.0
    %1321 = vmatpush2.msra.mxu0 0.0
    %1322 = vmatprep.subr.mxu0 0.0
    %1323 = vmatpush2.msra.mxu0 0.0
    %1324 = vmatprep.subr.mxu0 0.0
    %1325 = vmatpush2.msra.mxu0 0.0
    %1326 = vmatprep.subr.mxu0 0.0
    %1327 = vmatpush2.msra.mxu0 0.0
    %1328 = vmatprep.subr.mxu0 0.0
    %1329 = vmatpush2.msra.mxu0 0.0
    %1330 = vmatprep.subr.mxu0 0.0
    %1331 = vmatpush2.msra.mxu0 0.0
    %1332 = vmatprep.subr.mxu0 0.0
    %1333 = vmatpush2.msra.mxu0 0.0
    %1334 = vmatprep.subr.mxu0 0.0
    %1335 = vmatpush2.msra.mxu0 0.0
    %1336 = vmatprep.subr.mxu0 0.0
    %1337 = vmatpush2.msra.mxu0 0.0
    %1338 = vmatprep.mubr.f32.mxu0 0.0
    %1339 = vmatmul.mubr.f32.gmra.mxu0 %v1269
    %v1340 = vpop.f32.mrf.mxu0
    %v1341 = vadd.f32 %v1267, %v1340
    %v1342 = vpop.f32.mrf.mxu0
    %1343 = vmatprep.mubr.f32.mxu0 0.0
    %1344 = vmatmul.mubr.f32.gmra.mxu0 %v1272
    %v1345 = vpop.f32.mrf.mxu0
    %v1346 = vadd.f32 %v1267, %v1345
    %v1347 = vpop.f32.mrf.mxu0
    %1348 = vdwg.mxu0
    %v1349 = vmax.f32 %v1341, 0.0
    %v1350 = vmax.f32 %v1346, 0.0
    %v1351 = vlaneseq
    %v1352 = vshrl.u32 %v1351, 7
    %v1353 = vsub.s32 0, %v1352
    %v1354 = vrot.slane %v44, %v1353
    %vm1355 = vcmask 523264
    %v1357 = vsel %vm1355, %v1349, 0
    %v1360 = vsel %vm1355, %v1350, 0
    %1362 = vmatprep.subr.mxu0 0.0
    %1363 = vmatpush1.msra.mxu0 0.0
    %1364 = vmatprep.subr.mxu0 0.0
    %1365 = vmatpush1.msra.mxu0 0.0
    %1366 = vmatprep.subr.mxu0 0.0
    %1367 = vmatpush1.msra.mxu0 0.0
    %1368 = vmatprep.subr.mxu0 0.0
    %1369 = vmatpush1.msra.mxu0 0.0
    %1370 = vmatprep.subr.mxu0 0.0
    %1371 = vmatpush1.msra.mxu0 0.0
    %1372 = vmatprep.subr.mxu0 0.0
    %1373 = vmatpush1.msra.mxu0 0.0
    %1374 = vmatprep.subr.mxu0 0.0
    %1375 = vmatpush1.msra.mxu0 0.0
    %1376 = vmatprep.subr.mxu0 0.0
    %1377 = vmatpush1.msra.mxu0 0.0
    %1378 = vmatprep.subr.mxu0 0.0
    %1379 = vmatpush1.msra.mxu0 %v42
    %1380 = vmatprep.subr.mxu0 0.0
    %1381 = vmatpush1.msra.mxu0 %v41
    %1382 = vmatprep.subr.mxu0 0.0
    %1383 = vmatpush1.msra.mxu0 %v40
    %1384 = vmatprep.subr.mxu0 0.0
    %1385 = vmatpush1.msra.mxu0 %v39
    %1386 = vmatprep.subr.mxu0 0.0
    %1387 = vmatpush1.msra.mxu0 %v38
    %1388 = vmatprep.subr.mxu0 0.0
    %1389 = vmatpush1.msra.mxu0 %v37
    %1390 = vmatprep.subr.mxu0 0.0
    %1391 = vmatpush1.msra.mxu0 %v36
    %1392 = vmatprep.subr.mxu0 0.0
    %1393 = vmatpush1.msra.mxu0 %v35
    %1394 = vmatprep.subr.mxu0 0.0
    %1395 = vmatpush2.msra.mxu0 0.0
    %1396 = vmatprep.subr.mxu0 0.0
    %1397 = vmatpush2.msra.mxu0 0.0
    %1398 = vmatprep.subr.mxu0 0.0
    %1399 = vmatpush2.msra.mxu0 0.0
    %1400 = vmatprep.subr.mxu0 0.0
    %1401 = vmatpush2.msra.mxu0 0.0
    %1402 = vmatprep.subr.mxu0 0.0
    %1403 = vmatpush2.msra.mxu0 0.0
    %1404 = vmatprep.subr.mxu0 0.0
    %1405 = vmatpush2.msra.mxu0 0.0
    %1406 = vmatprep.subr.mxu0 0.0
    %1407 = vmatpush2.msra.mxu0 0.0
    %1408 = vmatprep.subr.mxu0 0.0
    %1409 = vmatpush2.msra.mxu0 0.0
    %1410 = vmatprep.subr.mxu0 0.0
    %1411 = vmatpush2.msra.mxu0 0.0
    %1412 = vmatprep.subr.mxu0 0.0
    %1413 = vmatpush2.msra.mxu0 0.0
    %1414 = vmatprep.subr.mxu0 0.0
    %1415 = vmatpush2.msra.mxu0 0.0
    %1416 = vmatprep.subr.mxu0 0.0
    %1417 = vmatpush2.msra.mxu0 0.0
    %1418 = vmatprep.subr.mxu0 0.0
    %1419 = vmatpush2.msra.mxu0 0.0
    %1420 = vmatprep.subr.mxu0 0.0
    %1421 = vmatpush2.msra.mxu0 0.0
    %1422 = vmatprep.subr.mxu0 0.0
    %1423 = vmatpush2.msra.mxu0 0.0
    %1424 = vmatprep.subr.mxu0 0.0
    %1425 = vmatpush2.msra.mxu0 0.0
    %1426 = vmatprep.mubr.f32.mxu0 0.0
    %1427 = vmatmul.mubr.f32.gmra.mxu0 %v1357
    %v1428 = vpop.f32.mrf.mxu0
    %v1429 = vadd.f32 %v1354, %v1428
    %v1430 = vpop.f32.mrf.mxu0
    %1431 = vmatprep.mubr.f32.mxu0 0.0
    %1432 = vmatmul.mubr.f32.gmra.mxu0 %v1360
    %v1433 = vpop.f32.mrf.mxu0
    %v1434 = vadd.f32 %v1354, %v1433
    %v1435 = vpop.f32.mrf.mxu0
    %1436 = vdwg.mxu0
    %v1437 = vadd.f32 %v1262, %v1429
    %v1438 = vadd.f32 %v1263, %v1434
    %v1439 = vsel %vm49, %v1437, 0.0
    %1440 = vadd.xlane.f32.xlu0 %v1439
    %v1441 = vpop.xlane.xlu0 %1440
    %v1442 = vsel %vm49, %v1438, 0.0
    %1443 = vadd.xlane.f32.xlu0 %v1442
    %v1444 = vpop.xlane.xlu0 %1443
    %v1445 = vmul.f32 %v1441, %v1231
    %v1446 = vmul.f32 %v1444, %v1231
    %v1447 = vsub.f32 %v1437, %v1445
    %v1448 = vsub.f32 %v1438, %v1446
    %v1449 = vmul.f32 %v1447, %v1447
    %v1450 = vmul.f32 %v1448, %v1448
    %v1451 = vsel %vm49, %v1449, 0.0
    %1452 = vadd.xlane.f32.xlu0 %v1451
    %v1453 = vpop.xlane.xlu0 %1452
    %v1454 = vsel %vm49, %v1450, 0.0
    %1455 = vadd.xlane.f32.xlu0 %v1454
    %v1456 = vpop.xlane.xlu0 %1455
    %v1457 = vmul.f32 %v1453, %v1231
    %v1458 = vmul.f32 %v1456, %v1231
    %v1459 = vadd.f32 %v1457, 1e-05
    %v1460 = vadd.f32 %v1458, 1e-05
    %v1461 = vrsqrt.pop %v1459
    %v1462 = vrsqrt.pop %v1460
    %v1463 = vmul.f32 %v1447, %v1461
    %v1464 = vmul.f32 %v1448, %v1462
    %v1465 = vlaneseq
    %v1466 = vshrl.u32 %v1465, 7
    %v1467 = vsub.s32 6, %v1466
    %v1468 = vrot.slane %v43, %v1467
    %v1469 = vmul.f32 %v1463, %v1468
    %v1470 = vmul.f32 %v1464, %v1468
    %v1471 = vlaneseq
    %v1472 = vshrl.u32 %v1471, 7
    %v1473 = vsub.s32 7, %v1472
    %v1474 = vrot.slane %v43, %v1473
    %v1475 = vadd.f32 %v1469, %v1474
    %v1476 = vadd.f32 %v1470, %v1474
    %1477 = vst.msk [vmem:[#allocation2] sm:$0xff] %vm49, %v1475
    %1478 = vst.msk [vmem:[#allocation2 + $0x8] sm:$0xff] %vm49, %v1476
    // Predicated region
    $region22: #{transformer_encoder_layer.1} parent=1 // pred_check
      _
    $region23: #{transformer_encoder_layer.1} parent=1 // pred_check_branch
      %1480 = sbr.rel (0) target = $region25
    $region24: #{transformer_encoder_layer.1} parent=1 // pred_region
      %s1482 = ssub.s32 256, 256
      %1483 = vsyncadd [#allocation3], %s1482
      %s1484 = sshll.u32 [#allocation2], 4
      %s1485 = int_to_ptr.vmem [resolvable:$true] %s1484
      %1490 = dma.vmem_to_hbm [thread:$0]  %s1485, 256, %s5, [#allocation3], 128, 128, 8
    $region25: #{transformer_encoder_layer.1} parent=1 // pred_fallthru
      _
    // Predicated region
    $region26: #{transformer_encoder_layer.1} parent=1 // pred_check
      _
    $region27: #{transformer_encoder_layer.1} parent=1 // pred_check_branch
      %1492 = sbr.rel (0) target = $region29
    $region28: #{transformer_encoder_layer.1} parent=1 // pred_region
      %1493 = dma.done [#allocation3], 256
    $region29: #{transformer_encoder_layer.1} parent=1 // pred_fallthru
      _
    %1494 = vsyncpa [#allocation3], 1

</llo_original>
